<compile_context>
chip_gen: v5e
topology: v5e:2x2
jax: 0.10.0
libtpu: 0.0.40
codegen_flags: <defaults>
</compile_context>

<pallas_src>
import functools

import jax
import jax.numpy as jnp
from jax.experimental import pallas as pl
from jax.experimental.pallas import tpu as pltpu


def _vmem_limit_bytes():
    """Generation-aware scoped-VMEM limit: 3/4 of reported capacity."""
    try:
        cap = int(pltpu.get_tpu_info().vmem_capacity_bytes)
    except Exception:
        cap = 64 * 1024 * 1024          # conservative (v7x) fallback
    return (cap * 3) // 4               # ~96 MiB on v5e/v6e, ~48 MiB on v7x


def double_conv(x_nchw, params, *, compute_dtype=jnp.float32):
    """DoubleConv.forward: conv3x3 -> ReLU -> conv3x3 -> ReLU (NCHW in/out)."""
    w1, b1, w2, b2 = params                      # w*: HWIO (3,3,Ci,Co), b*: (Co,)
    N, Cin, H, W = x_nchw.shape
    Cout = w1.shape[-1]
    HW = H * W

    # Free reshape: NCHW is already channel-leading with HW contiguous, so the
    # lane-dense (N, C, HW) form needs NO transpose over HBM.
    x_flat = x_nchw.reshape(N, Cin, HW)

    # Per-tap weights (tap order: dy outer, dx inner == ky*3+kx row-major).
    w1_t = jnp.transpose(w1, (0, 1, 3, 2)).reshape(9, Cout, Cin).astype(compute_dtype)
    w2_t = jnp.transpose(w2, (0, 1, 3, 2)).reshape(9, Cout, Cout).astype(compute_dtype)
    b1_r = b1.reshape(Cout, 1).astype(jnp.float32)
    b2_r = b2.reshape(Cout, 1).astype(jnp.float32)

    # Column-boundary masks over the flattened spatial axis (lane axis):
    #   row 0: valid outputs for dx=-1 (col != 0)
    #   row 1: valid outputs for dx=+1 (col != W-1)
    cols = jnp.arange(HW, dtype=jnp.int32) % W
    cmask = jnp.stack([cols != 0, cols != W - 1]).astype(compute_dtype)   # (2, HW)

    # Whole batch in one grid step when possible (amortizes per-step overhead).
    b_tile = N if N <= 8 else max(d for d in range(1, 9) if N % d == 0)

    def kernel(x_ref, w1_ref, b1_ref, w2_ref, b2_ref, cm_ref, o_ref):
        w1_all = w1_ref[...]                       # (9, Cout, Cin)
        w2_all = w2_ref[...]                       # (9, Cout, Cout)
        b1v = b1_ref[...]                          # (Cout, 1) f32
        b2v = b2_ref[...]                          # (Cout, 1) f32
        cm = cm_ref[...]                           # (2, HW)
        mask_m1 = cm[0:1, :]                       # dx = -1
        mask_p1 = cm[1:2, :]                       # dx = +1

        def conv3x3(inp, w_all, cout):
            # Zero-extend the flat rows by (W+1) on each side: handles the
            # dy = +/-1 row halo with plain static lane slices (no roll, no
            # padded 2-D scratch, no im2col concatenate).
            zpad = jnp.zeros((inp.shape[0], W + 1), inp.dtype)
            padded = jnp.concatenate([zpad, inp, zpad], axis=1)   # (C, HW+2W+2)
            acc = jnp.zeros((cout, HW), jnp.float32)              # lane-dense acc
            t = 0
            for dy in (-1, 0, 1):
                for dx in (-1, 0, 1):
                    s = (dy + 1) * W + (dx + 1)
                    xt = padded[:, s:s + HW]                      # (C, HW)
                    if dx == -1:
                        xt = xt * mask_m1
                    elif dx == 1:
                        xt = xt * mask_p1
                    # NT per-tap matmul: (Cout, C) @ (C, HW) -> (Cout, HW).
                    acc = acc + jnp.dot(w_all[t], xt,
                                        preferred_element_type=jnp.float32)
                    t += 1
            return acc

        # Per-image inner loop (static): folding B into the matmul M dim would
        # require a cross-sublane relayout to (C, B*HW); the MXU is idle at
        # these channel counts, so relayout-free per-image dots are cheaper.
        for b in range(b_tile):
            xb = x_ref[b].astype(compute_dtype)                   # (Cin, HW)
            y1 = jnp.maximum(conv3x3(xb, w1_all, Cout) + b1v, 0.0)
            y1c = y1.astype(compute_dtype)                        # stays in vregs
            y2 = jnp.maximum(conv3x3(y1c, w2_all, Cout) + b2v, 0.0)
            o_ref[b] = y2.astype(o_ref.dtype)                     # lane-dense store

    out_flat = pl.pallas_call(
        kernel,
        out_shape=jax.ShapeDtypeStruct((N, Cout, HW), x_nchw.dtype),
        grid_spec=pltpu.PrefetchScalarGridSpec(
            num_scalar_prefetch=0,
            grid=(N // b_tile,),
            in_specs=[
                pl.BlockSpec((b_tile, Cin, HW), lambda n: (n, 0, 0)),
                pl.BlockSpec((9, Cout, Cin), lambda n: (0, 0, 0)),
                pl.BlockSpec((Cout, 1), lambda n: (0, 0)),
                pl.BlockSpec((9, Cout, Cout), lambda n: (0, 0, 0)),
                pl.BlockSpec((Cout, 1), lambda n: (0, 0)),
                pl.BlockSpec((2, HW), lambda n: (0, 0)),
            ],
            out_specs=pl.BlockSpec((b_tile, Cout, HW), lambda n: (n, 0, 0)),
        ),
        compiler_params=pltpu.CompilerParams(
            dimension_semantics=("parallel",),
            vmem_limit_bytes=_vmem_limit_bytes(),
        ),
    )(x_flat, w1_t, b1_r, w2_t, b2_r, cmask)

    return out_flat.reshape(N, Cout, H, W)       # free reshape, already NCHW order


def init_double_conv_params(key, in_channels, out_channels):
    """Deterministic init. PyTorch weight layout (Cout,Cin,3,3) -> HWIO."""
    k1, k2, k3, k4 = jax.random.split(key, 4)
    fan1 = in_channels * 9
    fan2 = out_channels * 9
    bound1 = 1.0 / jnp.sqrt(fan1)
    bound2 = 1.0 / jnp.sqrt(fan2)
    w1_oihw = jax.random.uniform(k1, (out_channels, in_channels, 3, 3),
                                 jnp.float32, -bound1, bound1)
    b1 = jax.random.uniform(k2, (out_channels,), jnp.float32, -bound1, bound1)
    w2_oihw = jax.random.uniform(k3, (out_channels, out_channels, 3, 3),
                                 jnp.float32, -bound2, bound2)
    b2 = jax.random.uniform(k4, (out_channels,), jnp.float32, -bound2, bound2)
    w1 = jnp.transpose(w1_oihw, (2, 3, 1, 0))    # OIHW -> HWIO
    w2 = jnp.transpose(w2_oihw, (2, 3, 1, 0))
    return (w1, b1, w2, b2)


def _reference_double_conv(x_nchw, params):
    """Pure-JAX reference (lax.conv) for correctness check."""
    w1, b1, w2, b2 = params
    dn = jax.lax.conv_dimension_numbers(x_nchw.shape, w1.shape,
                                        ("NCHW", "HWIO", "NCHW"))
    y = jax.lax.conv_general_dilated(x_nchw, w1, (1, 1), "SAME",
                                     dimension_numbers=dn)
    y = jax.nn.relu(y + b1[None, :, None, None])
    dn2 = jax.lax.conv_dimension_numbers(y.shape, w2.shape,
                                         ("NCHW", "HWIO", "NCHW"))
    y = jax.lax.conv_general_dilated(y, w2, (1, 1), "SAME",
                                     dimension_numbers=dn2)
    y = jax.nn.relu(y + b2[None, :, None, None])
    return y


if __name__ == "__main__":
    key = jax.random.PRNGKey(0)
    k_x, k_p = jax.random.split(key)

    N, Cin, H, W = 2, 4, 16, 16
    Cout = 8

    x = jax.random.normal(k_x, (N, Cin, H, W), jnp.float32)   # NCHW input
    params = init_double_conv_params(k_p, Cin, Cout)

    ref = _reference_double_conv(x, params)

    # Default f32 compute path: tight numerical check of the conv math.
    run_f32 = jax.jit(functools.partial(double_conv, compute_dtype=jnp.float32))
    out_f32 = jax.block_until_ready(run_f32(x, params))
    assert out_f32.shape == (N, Cout, H, W)
    assert jnp.allclose(out_f32, ref, atol=2e-3, rtol=2e-3)

    # Optional bf16-MXU path (f32 accumulate + f32 epilogue): looser tolerance
    # accounts for bf16 operand rounding plus the one bf16 rounding of y1.
    run_bf16 = jax.jit(functools.partial(double_conv, compute_dtype=jnp.bfloat16))
    out_bf16 = jax.block_until_ready(run_bf16(x, params))
    assert out_bf16.shape == (N, Cout, H, W)
    assert jnp.allclose(out_bf16, ref, atol=3e-2, rtol=3e-2)

    print("KERNEL_OK")
</pallas_src>

<mosaic_0001>
module attributes {stable_mosaic.version = 11 : i64} {
  func.func @kernel(%arg0: i32, %arg1: memref<2x4x256xf32, #tpu.memory_space<vmem>>, %arg2: memref<9x8x4xf32, #tpu.memory_space<vmem>>, %arg3: memref<8x1xf32, #tpu.memory_space<vmem>>, %arg4: memref<9x8x8xf32, #tpu.memory_space<vmem>>, %arg5: memref<8x1xf32, #tpu.memory_space<vmem>>, %arg6: memref<2x256xf32, #tpu.memory_space<vmem>>, %arg7: memref<2x8x256xf32, #tpu.memory_space<vmem>>) attributes {dimension_semantics = [#tpu.dimension_semantics<parallel>], iteration_bounds = array<i64: 1>, scalar_prefetch = 0 : i64, scratch_operands = 0 : i64, tpu.core_type = #tpu.core_type<tc>, window_params = [{transform_indices = @transform_0, window_bounds = array<i64: 2, 4, 256>}, {pipeline_mode = #tpu.pipeline_mode<synchronous>, transform_indices = @transform_1, window_bounds = array<i64: 9, 8, 4>}, {pipeline_mode = #tpu.pipeline_mode<synchronous>, transform_indices = @transform_2, window_bounds = array<i64: 8, 1>}, {pipeline_mode = #tpu.pipeline_mode<synchronous>, transform_indices = @transform_3, window_bounds = array<i64: 9, 8, 8>}, {pipeline_mode = #tpu.pipeline_mode<synchronous>, transform_indices = @transform_4, window_bounds = array<i64: 8, 1>}, {pipeline_mode = #tpu.pipeline_mode<synchronous>, transform_indices = @transform_5, window_bounds = array<i64: 2, 256>}, {transform_indices = @transform_6, window_bounds = array<i64: 2, 8, 256>}]} {
    %c0 = arith.constant 0 : index
    %c0_0 = arith.constant 0 : index
    %c0_1 = arith.constant 0 : index
    %0 = vector.load %arg2[%c0, %c0_0, %c0_1] : memref<9x8x4xf32, #tpu.memory_space<vmem>>, vector<9x8x4xf32>
    %c0_2 = arith.constant 0 : index
    %c0_3 = arith.constant 0 : index
    %c0_4 = arith.constant 0 : index
    %1 = vector.load %arg4[%c0_2, %c0_3, %c0_4] : memref<9x8x8xf32, #tpu.memory_space<vmem>>, vector<9x8x8xf32>
    %c0_5 = arith.constant 0 : index
    %c0_6 = arith.constant 0 : index
    %2 = vector.load %arg3[%c0_5, %c0_6] : memref<8x1xf32, #tpu.memory_space<vmem>>, vector<8x1xf32>
    %c0_7 = arith.constant 0 : index
    %c0_8 = arith.constant 0 : index
    %3 = vector.load %arg5[%c0_7, %c0_8] : memref<8x1xf32, #tpu.memory_space<vmem>>, vector<8x1xf32>
    %c0_9 = arith.constant 0 : index
    %c0_10 = arith.constant 0 : index
    %4 = vector.load %arg6[%c0_9, %c0_10] : memref<2x256xf32, #tpu.memory_space<vmem>>, vector<2x256xf32>
    %5 = vector.extract_strided_slice %4 {offsets = [0, 0], sizes = [1, 256], strides = [1, 1]} : vector<2x256xf32> to vector<1x256xf32>
    %6 = vector.extract_strided_slice %4 {offsets = [1, 0], sizes = [1, 256], strides = [1, 1]} : vector<2x256xf32> to vector<1x256xf32>
    %c0_11 = arith.constant 0 : index
    %c0_12 = arith.constant 0 : index
    %c0_13 = arith.constant 0 : index
    %7 = vector.load %arg1[%c0_11, %c0_12, %c0_13] : memref<2x4x256xf32, #tpu.memory_space<vmem>>, vector<1x4x256xf32>
    %8 = vector.shape_cast %7 : vector<1x4x256xf32> to vector<4x256xf32>
    %cst = arith.constant 0.000000e+00 : f32
    %9 = vector.broadcast %cst : f32 to vector<4x17xf32>
    %10 = tpu.concatenate %9, %8, %9 in 1 : vector<4x17xf32>, vector<4x256xf32>, vector<4x17xf32> -> vector<4x290xf32>
    %cst_14 = arith.constant 0.000000e+00 : f32
    %11 = vector.broadcast %cst_14 : f32 to vector<8x256xf32>
    %12 = vector.extract_strided_slice %10 {offsets = [0, 0], sizes = [4, 256], strides = [1, 1]} : vector<4x290xf32> to vector<4x256xf32>
    %13 = vector.broadcast %5 : vector<1x256xf32> to vector<4x256xf32>
    %14 = arith.mulf %12, %13 : vector<4x256xf32>
    %15 = vector.extract_strided_slice %0 {offsets = [0, 0, 0], sizes = [1, 8, 4], strides = [1, 1, 1]} : vector<9x8x4xf32> to vector<1x8x4xf32>
    %16 = vector.shape_cast %15 : vector<1x8x4xf32> to vector<8x4xf32>
    %cst_15 = arith.constant dense<0.000000e+00> : vector<8x256xf32>
    %17 = tpu.matmul %16, %14, %cst_15 {dimension_numbers = #tpu.dot_dimension_numbers<[1], [0], [0], [1], [0, 0, 1, 1], [], []>} : vector<8x4xf32>, vector<4x256xf32>, vector<8x256xf32> -> vector<8x256xf32>
    %18 = arith.addf %11, %17 : vector<8x256xf32>
    %19 = vector.extract_strided_slice %10 {offsets = [0, 1], sizes = [4, 256], strides = [1, 1]} : vector<4x290xf32> to vector<4x256xf32>
    %20 = vector.extract_strided_slice %0 {offsets = [1, 0, 0], sizes = [1, 8, 4], strides = [1, 1, 1]} : vector<9x8x4xf32> to vector<1x8x4xf32>
    %21 = vector.shape_cast %20 : vector<1x8x4xf32> to vector<8x4xf32>
    %cst_16 = arith.constant dense<0.000000e+00> : vector<8x256xf32>
    %22 = tpu.matmul %21, %19, %cst_16 {dimension_numbers = #tpu.dot_dimension_numbers<[1], [0], [0], [1], [0, 0, 1, 1], [], []>} : vector<8x4xf32>, vector<4x256xf32>, vector<8x256xf32> -> vector<8x256xf32>
    %23 = arith.addf %18, %22 : vector<8x256xf32>
    %24 = vector.extract_strided_slice %10 {offsets = [0, 2], sizes = [4, 256], strides = [1, 1]} : vector<4x290xf32> to vector<4x256xf32>
    %25 = vector.broadcast %6 : vector<1x256xf32> to vector<4x256xf32>
    %26 = arith.mulf %24, %25 : vector<4x256xf32>
    %27 = vector.extract_strided_slice %0 {offsets = [2, 0, 0], sizes = [1, 8, 4], strides = [1, 1, 1]} : vector<9x8x4xf32> to vector<1x8x4xf32>
    %28 = vector.shape_cast %27 : vector<1x8x4xf32> to vector<8x4xf32>
    %cst_17 = arith.constant dense<0.000000e+00> : vector<8x256xf32>
    %29 = tpu.matmul %28, %26, %cst_17 {dimension_numbers = #tpu.dot_dimension_numbers<[1], [0], [0], [1], [0, 0, 1, 1], [], []>} : vector<8x4xf32>, vector<4x256xf32>, vector<8x256xf32> -> vector<8x256xf32>
    %30 = arith.addf %23, %29 : vector<8x256xf32>
    %31 = vector.extract_strided_slice %10 {offsets = [0, 16], sizes = [4, 256], strides = [1, 1]} : vector<4x290xf32> to vector<4x256xf32>
    %32 = vector.broadcast %5 : vector<1x256xf32> to vector<4x256xf32>
    %33 = arith.mulf %31, %32 : vector<4x256xf32>
    %34 = vector.extract_strided_slice %0 {offsets = [3, 0, 0], sizes = [1, 8, 4], strides = [1, 1, 1]} : vector<9x8x4xf32> to vector<1x8x4xf32>
    %35 = vector.shape_cast %34 : vector<1x8x4xf32> to vector<8x4xf32>
    %cst_18 = arith.constant dense<0.000000e+00> : vector<8x256xf32>
    %36 = tpu.matmul %35, %33, %cst_18 {dimension_numbers = #tpu.dot_dimension_numbers<[1], [0], [0], [1], [0, 0, 1, 1], [], []>} : vector<8x4xf32>, vector<4x256xf32>, vector<8x256xf32> -> vector<8x256xf32>
    %37 = arith.addf %30, %36 : vector<8x256xf32>
    %38 = vector.extract_strided_slice %10 {offsets = [0, 17], sizes = [4, 256], strides = [1, 1]} : vector<4x290xf32> to vector<4x256xf32>
    %39 = vector.extract_strided_slice %0 {offsets = [4, 0, 0], sizes = [1, 8, 4], strides = [1, 1, 1]} : vector<9x8x4xf32> to vector<1x8x4xf32>
    %40 = vector.shape_cast %39 : vector<1x8x4xf32> to vector<8x4xf32>
    %cst_19 = arith.constant dense<0.000000e+00> : vector<8x256xf32>
    %41 = tpu.matmul %40, %38, %cst_19 {dimension_numbers = #tpu.dot_dimension_numbers<[1], [0], [0], [1], [0, 0, 1, 1], [], []>} : vector<8x4xf32>, vector<4x256xf32>, vector<8x256xf32> -> vector<8x256xf32>
    %42 = arith.addf %37, %41 : vector<8x256xf32>
    %43 = vector.extract_strided_slice %10 {offsets = [0, 18], sizes = [4, 256], strides = [1, 1]} : vector<4x290xf32> to vector<4x256xf32>
    %44 = vector.broadcast %6 : vector<1x256xf32> to vector<4x256xf32>
    %45 = arith.mulf %43, %44 : vector<4x256xf32>
    %46 = vector.extract_strided_slice %0 {offsets = [5, 0, 0], sizes = [1, 8, 4], strides = [1, 1, 1]} : vector<9x8x4xf32> to vector<1x8x4xf32>
    %47 = vector.shape_cast %46 : vector<1x8x4xf32> to vector<8x4xf32>
    %cst_20 = arith.constant dense<0.000000e+00> : vector<8x256xf32>
    %48 = tpu.matmul %47, %45, %cst_20 {dimension_numbers = #tpu.dot_dimension_numbers<[1], [0], [0], [1], [0, 0, 1, 1], [], []>} : vector<8x4xf32>, vector<4x256xf32>, vector<8x256xf32> -> vector<8x256xf32>
    %49 = arith.addf %42, %48 : vector<8x256xf32>
    %50 = vector.extract_strided_slice %10 {offsets = [0, 32], sizes = [4, 256], strides = [1, 1]} : vector<4x290xf32> to vector<4x256xf32>
    %51 = vector.broadcast %5 : vector<1x256xf32> to vector<4x256xf32>
    %52 = arith.mulf %50, %51 : vector<4x256xf32>
    %53 = vector.extract_strided_slice %0 {offsets = [6, 0, 0], sizes = [1, 8, 4], strides = [1, 1, 1]} : vector<9x8x4xf32> to vector<1x8x4xf32>
    %54 = vector.shape_cast %53 : vector<1x8x4xf32> to vector<8x4xf32>
    %cst_21 = arith.constant dense<0.000000e+00> : vector<8x256xf32>
    %55 = tpu.matmul %54, %52, %cst_21 {dimension_numbers = #tpu.dot_dimension_numbers<[1], [0], [0], [1], [0, 0, 1, 1], [], []>} : vector<8x4xf32>, vector<4x256xf32>, vector<8x256xf32> -> vector<8x256xf32>
    %56 = arith.addf %49, %55 : vector<8x256xf32>
    %57 = vector.extract_strided_slice %10 {offsets = [0, 33], sizes = [4, 256], strides = [1, 1]} : vector<4x290xf32> to vector<4x256xf32>
    %58 = vector.extract_strided_slice %0 {offsets = [7, 0, 0], sizes = [1, 8, 4], strides = [1, 1, 1]} : vector<9x8x4xf32> to vector<1x8x4xf32>
    %59 = vector.shape_cast %58 : vector<1x8x4xf32> to vector<8x4xf32>
    %cst_22 = arith.constant dense<0.000000e+00> : vector<8x256xf32>
    %60 = tpu.matmul %59, %57, %cst_22 {dimension_numbers = #tpu.dot_dimension_numbers<[1], [0], [0], [1], [0, 0, 1, 1], [], []>} : vector<8x4xf32>, vector<4x256xf32>, vector<8x256xf32> -> vector<8x256xf32>
    %61 = arith.addf %56, %60 : vector<8x256xf32>
    %62 = vector.extract_strided_slice %10 {offsets = [0, 34], sizes = [4, 256], strides = [1, 1]} : vector<4x290xf32> to vector<4x256xf32>
    %63 = vector.broadcast %6 : vector<1x256xf32> to vector<4x256xf32>
    %64 = arith.mulf %62, %63 : vector<4x256xf32>
    %65 = vector.extract_strided_slice %0 {offsets = [8, 0, 0], sizes = [1, 8, 4], strides = [1, 1, 1]} : vector<9x8x4xf32> to vector<1x8x4xf32>
    %66 = vector.shape_cast %65 : vector<1x8x4xf32> to vector<8x4xf32>
    %cst_23 = arith.constant dense<0.000000e+00> : vector<8x256xf32>
    %67 = tpu.matmul %66, %64, %cst_23 {dimension_numbers = #tpu.dot_dimension_numbers<[1], [0], [0], [1], [0, 0, 1, 1], [], []>} : vector<8x4xf32>, vector<4x256xf32>, vector<8x256xf32> -> vector<8x256xf32>
    %68 = arith.addf %61, %67 : vector<8x256xf32>
    %69 = vector.broadcast %2 : vector<8x1xf32> to vector<8x256xf32>
    %70 = arith.addf %68, %69 : vector<8x256xf32>
    %cst_24 = arith.constant 0.000000e+00 : f32
    %71 = vector.broadcast %cst_24 : f32 to vector<8x256xf32>
    %72 = arith.maximumf %70, %71 : vector<8x256xf32>
    %cst_25 = arith.constant 0.000000e+00 : f32
    %73 = vector.broadcast %cst_25 : f32 to vector<8x17xf32>
    %74 = tpu.concatenate %73, %72, %73 in 1 : vector<8x17xf32>, vector<8x256xf32>, vector<8x17xf32> -> vector<8x290xf32>
    %cst_26 = arith.constant 0.000000e+00 : f32
    %75 = vector.broadcast %cst_26 : f32 to vector<8x256xf32>
    %76 = vector.extract_strided_slice %74 {offsets = [0, 0], sizes = [8, 256], strides = [1, 1]} : vector<8x290xf32> to vector<8x256xf32>
    %77 = vector.broadcast %5 : vector<1x256xf32> to vector<8x256xf32>
    %78 = arith.mulf %76, %77 : vector<8x256xf32>
    %79 = vector.extract_strided_slice %1 {offsets = [0, 0, 0], sizes = [1, 8, 8], strides = [1, 1, 1]} : vector<9x8x8xf32> to vector<1x8x8xf32>
    %80 = vector.shape_cast %79 : vector<1x8x8xf32> to vector<8x8xf32>
    %cst_27 = arith.constant dense<0.000000e+00> : vector<8x256xf32>
    %81 = tpu.matmul %80, %78, %cst_27 {dimension_numbers = #tpu.dot_dimension_numbers<[1], [0], [0], [1], [0, 0, 1, 1], [], []>} : vector<8x8xf32>, vector<8x256xf32>, vector<8x256xf32> -> vector<8x256xf32>
    %82 = arith.addf %75, %81 : vector<8x256xf32>
    %83 = vector.extract_strided_slice %74 {offsets = [0, 1], sizes = [8, 256], strides = [1, 1]} : vector<8x290xf32> to vector<8x256xf32>
    %84 = vector.extract_strided_slice %1 {offsets = [1, 0, 0], sizes = [1, 8, 8], strides = [1, 1, 1]} : vector<9x8x8xf32> to vector<1x8x8xf32>
    %85 = vector.shape_cast %84 : vector<1x8x8xf32> to vector<8x8xf32>
    %cst_28 = arith.constant dense<0.000000e+00> : vector<8x256xf32>
    %86 = tpu.matmul %85, %83, %cst_28 {dimension_numbers = #tpu.dot_dimension_numbers<[1], [0], [0], [1], [0, 0, 1, 1], [], []>} : vector<8x8xf32>, vector<8x256xf32>, vector<8x256xf32> -> vector<8x256xf32>
    %87 = arith.addf %82, %86 : vector<8x256xf32>
    %88 = vector.extract_strided_slice %74 {offsets = [0, 2], sizes = [8, 256], strides = [1, 1]} : vector<8x290xf32> to vector<8x256xf32>
    %89 = vector.broadcast %6 : vector<1x256xf32> to vector<8x256xf32>
    %90 = arith.mulf %88, %89 : vector<8x256xf32>
    %91 = vector.extract_strided_slice %1 {offsets = [2, 0, 0], sizes = [1, 8, 8], strides = [1, 1, 1]} : vector<9x8x8xf32> to vector<1x8x8xf32>
    %92 = vector.shape_cast %91 : vector<1x8x8xf32> to vector<8x8xf32>
    %cst_29 = arith.constant dense<0.000000e+00> : vector<8x256xf32>
    %93 = tpu.matmul %92, %90, %cst_29 {dimension_numbers = #tpu.dot_dimension_numbers<[1], [0], [0], [1], [0, 0, 1, 1], [], []>} : vector<8x8xf32>, vector<8x256xf32>, vector<8x256xf32> -> vector<8x256xf32>
    %94 = arith.addf %87, %93 : vector<8x256xf32>
    %95 = vector.extract_strided_slice %74 {offsets = [0, 16], sizes = [8, 256], strides = [1, 1]} : vector<8x290xf32> to vector<8x256xf32>
    %96 = vector.broadcast %5 : vector<1x256xf32> to vector<8x256xf32>
    %97 = arith.mulf %95, %96 : vector<8x256xf32>
    %98 = vector.extract_strided_slice %1 {offsets = [3, 0, 0], sizes = [1, 8, 8], strides = [1, 1, 1]} : vector<9x8x8xf32> to vector<1x8x8xf32>
    %99 = vector.shape_cast %98 : vector<1x8x8xf32> to vector<8x8xf32>
    %cst_30 = arith.constant dense<0.000000e+00> : vector<8x256xf32>
    %100 = tpu.matmul %99, %97, %cst_30 {dimension_numbers = #tpu.dot_dimension_numbers<[1], [0], [0], [1], [0, 0, 1, 1], [], []>} : vector<8x8xf32>, vector<8x256xf32>, vector<8x256xf32> -> vector<8x256xf32>
    %101 = arith.addf %94, %100 : vector<8x256xf32>
    %102 = vector.extract_strided_slice %74 {offsets = [0, 17], sizes = [8, 256], strides = [1, 1]} : vector<8x290xf32> to vector<8x256xf32>
    %103 = vector.extract_strided_slice %1 {offsets = [4, 0, 0], sizes = [1, 8, 8], strides = [1, 1, 1]} : vector<9x8x8xf32> to vector<1x8x8xf32>
    %104 = vector.shape_cast %103 : vector<1x8x8xf32> to vector<8x8xf32>
    %cst_31 = arith.constant dense<0.000000e+00> : vector<8x256xf32>
    %105 = tpu.matmul %104, %102, %cst_31 {dimension_numbers = #tpu.dot_dimension_numbers<[1], [0], [0], [1], [0, 0, 1, 1], [], []>} : vector<8x8xf32>, vector<8x256xf32>, vector<8x256xf32> -> vector<8x256xf32>
    %106 = arith.addf %101, %105 : vector<8x256xf32>
    %107 = vector.extract_strided_slice %74 {offsets = [0, 18], sizes = [8, 256], strides = [1, 1]} : vector<8x290xf32> to vector<8x256xf32>
    %108 = vector.broadcast %6 : vector<1x256xf32> to vector<8x256xf32>
    %109 = arith.mulf %107, %108 : vector<8x256xf32>
    %110 = vector.extract_strided_slice %1 {offsets = [5, 0, 0], sizes = [1, 8, 8], strides = [1, 1, 1]} : vector<9x8x8xf32> to vector<1x8x8xf32>
    %111 = vector.shape_cast %110 : vector<1x8x8xf32> to vector<8x8xf32>
    %cst_32 = arith.constant dense<0.000000e+00> : vector<8x256xf32>
    %112 = tpu.matmul %111, %109, %cst_32 {dimension_numbers = #tpu.dot_dimension_numbers<[1], [0], [0], [1], [0, 0, 1, 1], [], []>} : vector<8x8xf32>, vector<8x256xf32>, vector<8x256xf32> -> vector<8x256xf32>
    %113 = arith.addf %106, %112 : vector<8x256xf32>
    %114 = vector.extract_strided_slice %74 {offsets = [0, 32], sizes = [8, 256], strides = [1, 1]} : vector<8x290xf32> to vector<8x256xf32>
    %115 = vector.broadcast %5 : vector<1x256xf32> to vector<8x256xf32>
    %116 = arith.mulf %114, %115 : vector<8x256xf32>
    %117 = vector.extract_strided_slice %1 {offsets = [6, 0, 0], sizes = [1, 8, 8], strides = [1, 1, 1]} : vector<9x8x8xf32> to vector<1x8x8xf32>
    %118 = vector.shape_cast %117 : vector<1x8x8xf32> to vector<8x8xf32>
    %cst_33 = arith.constant dense<0.000000e+00> : vector<8x256xf32>
    %119 = tpu.matmul %118, %116, %cst_33 {dimension_numbers = #tpu.dot_dimension_numbers<[1], [0], [0], [1], [0, 0, 1, 1], [], []>} : vector<8x8xf32>, vector<8x256xf32>, vector<8x256xf32> -> vector<8x256xf32>
    %120 = arith.addf %113, %119 : vector<8x256xf32>
    %121 = vector.extract_strided_slice %74 {offsets = [0, 33], sizes = [8, 256], strides = [1, 1]} : vector<8x290xf32> to vector<8x256xf32>
    %122 = vector.extract_strided_slice %1 {offsets = [7, 0, 0], sizes = [1, 8, 8], strides = [1, 1, 1]} : vector<9x8x8xf32> to vector<1x8x8xf32>
    %123 = vector.shape_cast %122 : vector<1x8x8xf32> to vector<8x8xf32>
    %cst_34 = arith.constant dense<0.000000e+00> : vector<8x256xf32>
    %124 = tpu.matmul %123, %121, %cst_34 {dimension_numbers = #tpu.dot_dimension_numbers<[1], [0], [0], [1], [0, 0, 1, 1], [], []>} : vector<8x8xf32>, vector<8x256xf32>, vector<8x256xf32> -> vector<8x256xf32>
    %125 = arith.addf %120, %124 : vector<8x256xf32>
    %126 = vector.extract_strided_slice %74 {offsets = [0, 34], sizes = [8, 256], strides = [1, 1]} : vector<8x290xf32> to vector<8x256xf32>
    %127 = vector.broadcast %6 : vector<1x256xf32> to vector<8x256xf32>
    %128 = arith.mulf %126, %127 : vector<8x256xf32>
    %129 = vector.extract_strided_slice %1 {offsets = [8, 0, 0], sizes = [1, 8, 8], strides = [1, 1, 1]} : vector<9x8x8xf32> to vector<1x8x8xf32>
    %130 = vector.shape_cast %129 : vector<1x8x8xf32> to vector<8x8xf32>
    %cst_35 = arith.constant dense<0.000000e+00> : vector<8x256xf32>
    %131 = tpu.matmul %130, %128, %cst_35 {dimension_numbers = #tpu.dot_dimension_numbers<[1], [0], [0], [1], [0, 0, 1, 1], [], []>} : vector<8x8xf32>, vector<8x256xf32>, vector<8x256xf32> -> vector<8x256xf32>
    %132 = arith.addf %125, %131 : vector<8x256xf32>
    %133 = vector.broadcast %3 : vector<8x1xf32> to vector<8x256xf32>
    %134 = arith.addf %132, %133 : vector<8x256xf32>
    %cst_36 = arith.constant 0.000000e+00 : f32
    %135 = vector.broadcast %cst_36 : f32 to vector<8x256xf32>
    %136 = arith.maximumf %134, %135 : vector<8x256xf32>
    %c0_37 = arith.constant 0 : index
    %c0_38 = arith.constant 0 : index
    %c0_39 = arith.constant 0 : index
    %137 = vector.load %arg7[%c0_37, %c0_38, %c0_39] : memref<2x8x256xf32, #tpu.memory_space<vmem>>, vector<1x8x256xf32>
    %138 = vector.shape_cast %137 : vector<1x8x256xf32> to vector<8x256xf32>
    %139 = vector.shape_cast %136 : vector<8x256xf32> to vector<1x8x256xf32>
    tpu.vector_store %arg7[%c0_37, %c0_38, %c0_39], %139 {strides = array<i32>} : memref<2x8x256xf32, #tpu.memory_space<vmem>>, vector<1x8x256xf32>,
    %c1 = arith.constant 1 : index
    %c0_40 = arith.constant 0 : index
    %c0_41 = arith.constant 0 : index
    %140 = vector.load %arg1[%c1, %c0_40, %c0_41] : memref<2x4x256xf32, #tpu.memory_space<vmem>>, vector<1x4x256xf32>
    %141 = vector.shape_cast %140 : vector<1x4x256xf32> to vector<4x256xf32>
    %cst_42 = arith.constant 0.000000e+00 : f32
    %142 = vector.broadcast %cst_42 : f32 to vector<4x17xf32>
    %143 = tpu.concatenate %142, %141, %142 in 1 : vector<4x17xf32>, vector<4x256xf32>, vector<4x17xf32> -> vector<4x290xf32>
    %cst_43 = arith.constant 0.000000e+00 : f32
    %144 = vector.broadcast %cst_43 : f32 to vector<8x256xf32>
    %145 = vector.extract_strided_slice %143 {offsets = [0, 0], sizes = [4, 256], strides = [1, 1]} : vector<4x290xf32> to vector<4x256xf32>
    %146 = vector.broadcast %5 : vector<1x256xf32> to vector<4x256xf32>
    %147 = arith.mulf %145, %146 : vector<4x256xf32>
    %148 = vector.extract_strided_slice %0 {offsets = [0, 0, 0], sizes = [1, 8, 4], strides = [1, 1, 1]} : vector<9x8x4xf32> to vector<1x8x4xf32>
    %149 = vector.shape_cast %148 : vector<1x8x4xf32> to vector<8x4xf32>
    %cst_44 = arith.constant dense<0.000000e+00> : vector<8x256xf32>
    %150 = tpu.matmul %149, %147, %cst_44 {dimension_numbers = #tpu.dot_dimension_numbers<[1], [0], [0], [1], [0, 0, 1, 1], [], []>} : vector<8x4xf32>, vector<4x256xf32>, vector<8x256xf32> -> vector<8x256xf32>
    %151 = arith.addf %144, %150 : vector<8x256xf32>
    %152 = vector.extract_strided_slice %143 {offsets = [0, 1], sizes = [4, 256], strides = [1, 1]} : vector<4x290xf32> to vector<4x256xf32>
    %153 = vector.extract_strided_slice %0 {offsets = [1, 0, 0], sizes = [1, 8, 4], strides = [1, 1, 1]} : vector<9x8x4xf32> to vector<1x8x4xf32>
    %154 = vector.shape_cast %153 : vector<1x8x4xf32> to vector<8x4xf32>
    %cst_45 = arith.constant dense<0.000000e+00> : vector<8x256xf32>
    %155 = tpu.matmul %154, %152, %cst_45 {dimension_numbers = #tpu.dot_dimension_numbers<[1], [0], [0], [1], [0, 0, 1, 1], [], []>} : vector<8x4xf32>, vector<4x256xf32>, vector<8x256xf32> -> vector<8x256xf32>
    %156 = arith.addf %151, %155 : vector<8x256xf32>
    %157 = vector.extract_strided_slice %143 {offsets = [0, 2], sizes = [4, 256], strides = [1, 1]} : vector<4x290xf32> to vector<4x256xf32>
    %158 = vector.broadcast %6 : vector<1x256xf32> to vector<4x256xf32>
    %159 = arith.mulf %157, %158 : vector<4x256xf32>
    %160 = vector.extract_strided_slice %0 {offsets = [2, 0, 0], sizes = [1, 8, 4], strides = [1, 1, 1]} : vector<9x8x4xf32> to vector<1x8x4xf32>
    %161 = vector.shape_cast %160 : vector<1x8x4xf32> to vector<8x4xf32>
    %cst_46 = arith.constant dense<0.000000e+00> : vector<8x256xf32>
    %162 = tpu.matmul %161, %159, %cst_46 {dimension_numbers = #tpu.dot_dimension_numbers<[1], [0], [0], [1], [0, 0, 1, 1], [], []>} : vector<8x4xf32>, vector<4x256xf32>, vector<8x256xf32> -> vector<8x256xf32>
    %163 = arith.addf %156, %162 : vector<8x256xf32>
    %164 = vector.extract_strided_slice %143 {offsets = [0, 16], sizes = [4, 256], strides = [1, 1]} : vector<4x290xf32> to vector<4x256xf32>
    %165 = vector.broadcast %5 : vector<1x256xf32> to vector<4x256xf32>
    %166 = arith.mulf %164, %165 : vector<4x256xf32>
    %167 = vector.extract_strided_slice %0 {offsets = [3, 0, 0], sizes = [1, 8, 4], strides = [1, 1, 1]} : vector<9x8x4xf32> to vector<1x8x4xf32>
    %168 = vector.shape_cast %167 : vector<1x8x4xf32> to vector<8x4xf32>
    %cst_47 = arith.constant dense<0.000000e+00> : vector<8x256xf32>
    %169 = tpu.matmul %168, %166, %cst_47 {dimension_numbers = #tpu.dot_dimension_numbers<[1], [0], [0], [1], [0, 0, 1, 1], [], []>} : vector<8x4xf32>, vector<4x256xf32>, vector<8x256xf32> -> vector<8x256xf32>
    %170 = arith.addf %163, %169 : vector<8x256xf32>
    %171 = vector.extract_strided_slice %143 {offsets = [0, 17], sizes = [4, 256], strides = [1, 1]} : vector<4x290xf32> to vector<4x256xf32>
    %172 = vector.extract_strided_slice %0 {offsets = [4, 0, 0], sizes = [1, 8, 4], strides = [1, 1, 1]} : vector<9x8x4xf32> to vector<1x8x4xf32>
    %173 = vector.shape_cast %172 : vector<1x8x4xf32> to vector<8x4xf32>
    %cst_48 = arith.constant dense<0.000000e+00> : vector<8x256xf32>
    %174 = tpu.matmul %173, %171, %cst_48 {dimension_numbers = #tpu.dot_dimension_numbers<[1], [0], [0], [1], [0, 0, 1, 1], [], []>} : vector<8x4xf32>, vector<4x256xf32>, vector<8x256xf32> -> vector<8x256xf32>
    %175 = arith.addf %170, %174 : vector<8x256xf32>
    %176 = vector.extract_strided_slice %143 {offsets = [0, 18], sizes = [4, 256], strides = [1, 1]} : vector<4x290xf32> to vector<4x256xf32>
    %177 = vector.broadcast %6 : vector<1x256xf32> to vector<4x256xf32>
    %178 = arith.mulf %176, %177 : vector<4x256xf32>
    %179 = vector.extract_strided_slice %0 {offsets = [5, 0, 0], sizes = [1, 8, 4], strides = [1, 1, 1]} : vector<9x8x4xf32> to vector<1x8x4xf32>
    %180 = vector.shape_cast %179 : vector<1x8x4xf32> to vector<8x4xf32>
    %cst_49 = arith.constant dense<0.000000e+00> : vector<8x256xf32>
    %181 = tpu.matmul %180, %178, %cst_49 {dimension_numbers = #tpu.dot_dimension_numbers<[1], [0], [0], [1], [0, 0, 1, 1], [], []>} : vector<8x4xf32>, vector<4x256xf32>, vector<8x256xf32> -> vector<8x256xf32>
    %182 = arith.addf %175, %181 : vector<8x256xf32>
    %183 = vector.extract_strided_slice %143 {offsets = [0, 32], sizes = [4, 256], strides = [1, 1]} : vector<4x290xf32> to vector<4x256xf32>
    %184 = vector.broadcast %5 : vector<1x256xf32> to vector<4x256xf32>
    %185 = arith.mulf %183, %184 : vector<4x256xf32>
    %186 = vector.extract_strided_slice %0 {offsets = [6, 0, 0], sizes = [1, 8, 4], strides = [1, 1, 1]} : vector<9x8x4xf32> to vector<1x8x4xf32>
    %187 = vector.shape_cast %186 : vector<1x8x4xf32> to vector<8x4xf32>
    %cst_50 = arith.constant dense<0.000000e+00> : vector<8x256xf32>
    %188 = tpu.matmul %187, %185, %cst_50 {dimension_numbers = #tpu.dot_dimension_numbers<[1], [0], [0], [1], [0, 0, 1, 1], [], []>} : vector<8x4xf32>, vector<4x256xf32>, vector<8x256xf32> -> vector<8x256xf32>
    %189 = arith.addf %182, %188 : vector<8x256xf32>
    %190 = vector.extract_strided_slice %143 {offsets = [0, 33], sizes = [4, 256], strides = [1, 1]} : vector<4x290xf32> to vector<4x256xf32>
    %191 = vector.extract_strided_slice %0 {offsets = [7, 0, 0], sizes = [1, 8, 4], strides = [1, 1, 1]} : vector<9x8x4xf32> to vector<1x8x4xf32>
    %192 = vector.shape_cast %191 : vector<1x8x4xf32> to vector<8x4xf32>
    %cst_51 = arith.constant dense<0.000000e+00> : vector<8x256xf32>
    %193 = tpu.matmul %192, %190, %cst_51 {dimension_numbers = #tpu.dot_dimension_numbers<[1], [0], [0], [1], [0, 0, 1, 1], [], []>} : vector<8x4xf32>, vector<4x256xf32>, vector<8x256xf32> -> vector<8x256xf32>
    %194 = arith.addf %189, %193 : vector<8x256xf32>
    %195 = vector.extract_strided_slice %143 {offsets = [0, 34], sizes = [4, 256], strides = [1, 1]} : vector<4x290xf32> to vector<4x256xf32>
    %196 = vector.broadcast %6 : vector<1x256xf32> to vector<4x256xf32>
    %197 = arith.mulf %195, %196 : vector<4x256xf32>
    %198 = vector.extract_strided_slice %0 {offsets = [8, 0, 0], sizes = [1, 8, 4], strides = [1, 1, 1]} : vector<9x8x4xf32> to vector<1x8x4xf32>
    %199 = vector.shape_cast %198 : vector<1x8x4xf32> to vector<8x4xf32>
    %cst_52 = arith.constant dense<0.000000e+00> : vector<8x256xf32>
    %200 = tpu.matmul %199, %197, %cst_52 {dimension_numbers = #tpu.dot_dimension_numbers<[1], [0], [0], [1], [0, 0, 1, 1], [], []>} : vector<8x4xf32>, vector<4x256xf32>, vector<8x256xf32> -> vector<8x256xf32>
    %201 = arith.addf %194, %200 : vector<8x256xf32>
    %202 = vector.broadcast %2 : vector<8x1xf32> to vector<8x256xf32>
    %203 = arith.addf %201, %202 : vector<8x256xf32>
    %cst_53 = arith.constant 0.000000e+00 : f32
    %204 = vector.broadcast %cst_53 : f32 to vector<8x256xf32>
    %205 = arith.maximumf %203, %204 : vector<8x256xf32>
    %cst_54 = arith.constant 0.000000e+00 : f32
    %206 = vector.broadcast %cst_54 : f32 to vector<8x17xf32>
    %207 = tpu.concatenate %206, %205, %206 in 1 : vector<8x17xf32>, vector<8x256xf32>, vector<8x17xf32> -> vector<8x290xf32>
    %cst_55 = arith.constant 0.000000e+00 : f32
    %208 = vector.broadcast %cst_55 : f32 to vector<8x256xf32>
    %209 = vector.extract_strided_slice %207 {offsets = [0, 0], sizes = [8, 256], strides = [1, 1]} : vector<8x290xf32> to vector<8x256xf32>
    %210 = vector.broadcast %5 : vector<1x256xf32> to vector<8x256xf32>
    %211 = arith.mulf %209, %210 : vector<8x256xf32>
    %212 = vector.extract_strided_slice %1 {offsets = [0, 0, 0], sizes = [1, 8, 8], strides = [1, 1, 1]} : vector<9x8x8xf32> to vector<1x8x8xf32>
    %213 = vector.shape_cast %212 : vector<1x8x8xf32> to vector<8x8xf32>
    %cst_56 = arith.constant dense<0.000000e+00> : vector<8x256xf32>
    %214 = tpu.matmul %213, %211, %cst_56 {dimension_numbers = #tpu.dot_dimension_numbers<[1], [0], [0], [1], [0, 0, 1, 1], [], []>} : vector<8x8xf32>, vector<8x256xf32>, vector<8x256xf32> -> vector<8x256xf32>
    %215 = arith.addf %208, %214 : vector<8x256xf32>
    %216 = vector.extract_strided_slice %207 {offsets = [0, 1], sizes = [8, 256], strides = [1, 1]} : vector<8x290xf32> to vector<8x256xf32>
    %217 = vector.extract_strided_slice %1 {offsets = [1, 0, 0], sizes = [1, 8, 8], strides = [1, 1, 1]} : vector<9x8x8xf32> to vector<1x8x8xf32>
    %218 = vector.shape_cast %217 : vector<1x8x8xf32> to vector<8x8xf32>
    %cst_57 = arith.constant dense<0.000000e+00> : vector<8x256xf32>
    %219 = tpu.matmul %218, %216, %cst_57 {dimension_numbers = #tpu.dot_dimension_numbers<[1], [0], [0], [1], [0, 0, 1, 1], [], []>} : vector<8x8xf32>, vector<8x256xf32>, vector<8x256xf32> -> vector<8x256xf32>
    %220 = arith.addf %215, %219 : vector<8x256xf32>
    %221 = vector.extract_strided_slice %207 {offsets = [0, 2], sizes = [8, 256], strides = [1, 1]} : vector<8x290xf32> to vector<8x256xf32>
    %222 = vector.broadcast %6 : vector<1x256xf32> to vector<8x256xf32>
    %223 = arith.mulf %221, %222 : vector<8x256xf32>
    %224 = vector.extract_strided_slice %1 {offsets = [2, 0, 0], sizes = [1, 8, 8], strides = [1, 1, 1]} : vector<9x8x8xf32> to vector<1x8x8xf32>
    %225 = vector.shape_cast %224 : vector<1x8x8xf32> to vector<8x8xf32>
    %cst_58 = arith.constant dense<0.000000e+00> : vector<8x256xf32>
    %226 = tpu.matmul %225, %223, %cst_58 {dimension_numbers = #tpu.dot_dimension_numbers<[1], [0], [0], [1], [0, 0, 1, 1], [], []>} : vector<8x8xf32>, vector<8x256xf32>, vector<8x256xf32> -> vector<8x256xf32>
    %227 = arith.addf %220, %226 : vector<8x256xf32>
    %228 = vector.extract_strided_slice %207 {offsets = [0, 16], sizes = [8, 256], strides = [1, 1]} : vector<8x290xf32> to vector<8x256xf32>
    %229 = vector.broadcast %5 : vector<1x256xf32> to vector<8x256xf32>
    %230 = arith.mulf %228, %229 : vector<8x256xf32>
    %231 = vector.extract_strided_slice %1 {offsets = [3, 0, 0], sizes = [1, 8, 8], strides = [1, 1, 1]} : vector<9x8x8xf32> to vector<1x8x8xf32>
    %232 = vector.shape_cast %231 : vector<1x8x8xf32> to vector<8x8xf32>
    %cst_59 = arith.constant dense<0.000000e+00> : vector<8x256xf32>
    %233 = tpu.matmul %232, %230, %cst_59 {dimension_numbers = #tpu.dot_dimension_numbers<[1], [0], [0], [1], [0, 0, 1, 1], [], []>} : vector<8x8xf32>, vector<8x256xf32>, vector<8x256xf32> -> vector<8x256xf32>
    %234 = arith.addf %227, %233 : vector<8x256xf32>
    %235 = vector.extract_strided_slice %207 {offsets = [0, 17], sizes = [8, 256], strides = [1, 1]} : vector<8x290xf32> to vector<8x256xf32>
    %236 = vector.extract_strided_slice %1 {offsets = [4, 0, 0], sizes = [1, 8, 8], strides = [1, 1, 1]} : vector<9x8x8xf32> to vector<1x8x8xf32>
    %237 = vector.shape_cast %236 : vector<1x8x8xf32> to vector<8x8xf32>
    %cst_60 = arith.constant dense<0.000000e+00> : vector<8x256xf32>
    %238 = tpu.matmul %237, %235, %cst_60 {dimension_numbers = #tpu.dot_dimension_numbers<[1], [0], [0], [1], [0, 0, 1, 1], [], []>} : vector<8x8xf32>, vector<8x256xf32>, vector<8x256xf32> -> vector<8x256xf32>
    %239 = arith.addf %234, %238 : vector<8x256xf32>
    %240 = vector.extract_strided_slice %207 {offsets = [0, 18], sizes = [8, 256], strides = [1, 1]} : vector<8x290xf32> to vector<8x256xf32>
    %241 = vector.broadcast %6 : vector<1x256xf32> to vector<8x256xf32>
    %242 = arith.mulf %240, %241 : vector<8x256xf32>
    %243 = vector.extract_strided_slice %1 {offsets = [5, 0, 0], sizes = [1, 8, 8], strides = [1, 1, 1]} : vector<9x8x8xf32> to vector<1x8x8xf32>
    %244 = vector.shape_cast %243 : vector<1x8x8xf32> to vector<8x8xf32>
    %cst_61 = arith.constant dense<0.000000e+00> : vector<8x256xf32>
    %245 = tpu.matmul %244, %242, %cst_61 {dimension_numbers = #tpu.dot_dimension_numbers<[1], [0], [0], [1], [0, 0, 1, 1], [], []>} : vector<8x8xf32>, vector<8x256xf32>, vector<8x256xf32> -> vector<8x256xf32>
    %246 = arith.addf %239, %245 : vector<8x256xf32>
    %247 = vector.extract_strided_slice %207 {offsets = [0, 32], sizes = [8, 256], strides = [1, 1]} : vector<8x290xf32> to vector<8x256xf32>
    %248 = vector.broadcast %5 : vector<1x256xf32> to vector<8x256xf32>
    %249 = arith.mulf %247, %248 : vector<8x256xf32>
    %250 = vector.extract_strided_slice %1 {offsets = [6, 0, 0], sizes = [1, 8, 8], strides = [1, 1, 1]} : vector<9x8x8xf32> to vector<1x8x8xf32>
    %251 = vector.shape_cast %250 : vector<1x8x8xf32> to vector<8x8xf32>
    %cst_62 = arith.constant dense<0.000000e+00> : vector<8x256xf32>
    %252 = tpu.matmul %251, %249, %cst_62 {dimension_numbers = #tpu.dot_dimension_numbers<[1], [0], [0], [1], [0, 0, 1, 1], [], []>} : vector<8x8xf32>, vector<8x256xf32>, vector<8x256xf32> -> vector<8x256xf32>
    %253 = arith.addf %246, %252 : vector<8x256xf32>
    %254 = vector.extract_strided_slice %207 {offsets = [0, 33], sizes = [8, 256], strides = [1, 1]} : vector<8x290xf32> to vector<8x256xf32>
    %255 = vector.extract_strided_slice %1 {offsets = [7, 0, 0], sizes = [1, 8, 8], strides = [1, 1, 1]} : vector<9x8x8xf32> to vector<1x8x8xf32>
    %256 = vector.shape_cast %255 : vector<1x8x8xf32> to vector<8x8xf32>
    %cst_63 = arith.constant dense<0.000000e+00> : vector<8x256xf32>
    %257 = tpu.matmul %256, %254, %cst_63 {dimension_numbers = #tpu.dot_dimension_numbers<[1], [0], [0], [1], [0, 0, 1, 1], [], []>} : vector<8x8xf32>, vector<8x256xf32>, vector<8x256xf32> -> vector<8x256xf32>
    %258 = arith.addf %253, %257 : vector<8x256xf32>
    %259 = vector.extract_strided_slice %207 {offsets = [0, 34], sizes = [8, 256], strides = [1, 1]} : vector<8x290xf32> to vector<8x256xf32>
    %260 = vector.broadcast %6 : vector<1x256xf32> to vector<8x256xf32>
    %261 = arith.mulf %259, %260 : vector<8x256xf32>
    %262 = vector.extract_strided_slice %1 {offsets = [8, 0, 0], sizes = [1, 8, 8], strides = [1, 1, 1]} : vector<9x8x8xf32> to vector<1x8x8xf32>
    %263 = vector.shape_cast %262 : vector<1x8x8xf32> to vector<8x8xf32>
    %cst_64 = arith.constant dense<0.000000e+00> : vector<8x256xf32>
    %264 = tpu.matmul %263, %261, %cst_64 {dimension_numbers = #tpu.dot_dimension_numbers<[1], [0], [0], [1], [0, 0, 1, 1], [], []>} : vector<8x8xf32>, vector<8x256xf32>, vector<8x256xf32> -> vector<8x256xf32>
    %265 = arith.addf %258, %264 : vector<8x256xf32>
    %266 = vector.broadcast %3 : vector<8x1xf32> to vector<8x256xf32>
    %267 = arith.addf %265, %266 : vector<8x256xf32>
    %cst_65 = arith.constant 0.000000e+00 : f32
    %268 = vector.broadcast %cst_65 : f32 to vector<8x256xf32>
    %269 = arith.maximumf %267, %268 : vector<8x256xf32>
    %c1_66 = arith.constant 1 : index
    %c0_67 = arith.constant 0 : index
    %c0_68 = arith.constant 0 : index
    %270 = vector.load %arg7[%c1_66, %c0_67, %c0_68] : memref<2x8x256xf32, #tpu.memory_space<vmem>>, vector<1x8x256xf32>
    %271 = vector.shape_cast %270 : vector<1x8x256xf32> to vector<8x256xf32>
    %272 = vector.shape_cast %269 : vector<8x256xf32> to vector<1x8x256xf32>
    tpu.vector_store %arg7[%c1_66, %c0_67, %c0_68], %272 {strides = array<i32>} : memref<2x8x256xf32, #tpu.memory_space<vmem>>, vector<1x8x256xf32>,
    return
  }
  func.func @transform_0(%arg0: i32) -> (i32, i32, i32) {
    %c0_i32 = arith.constant 0 : i32
    %c0_i32_0 = arith.constant 0 : i32
    %c0_i32_1 = arith.constant 0 : i32
    return %arg0, %c0_i32, %c0_i32_0 : i32, i32, i32
  }
  func.func @transform_1(%arg0: i32) -> (i32, i32, i32) {
    %c0_i32 = arith.constant 0 : i32
    %c0_i32_0 = arith.constant 0 : i32
    %c0_i32_1 = arith.constant 0 : i32
    %c0_i32_2 = arith.constant 0 : i32
    return %c0_i32, %c0_i32_0, %c0_i32_1 : i32, i32, i32
  }
  func.func @transform_2(%arg0: i32) -> (i32, i32) {
    %c0_i32 = arith.constant 0 : i32
    %c0_i32_0 = arith.constant 0 : i32
    %c0_i32_1 = arith.constant 0 : i32
    return %c0_i32, %c0_i32_0 : i32, i32
  }
  func.func @transform_3(%arg0: i32) -> (i32, i32, i32) {
    %c0_i32 = arith.constant 0 : i32
    %c0_i32_0 = arith.constant 0 : i32
    %c0_i32_1 = arith.constant 0 : i32
    %c0_i32_2 = arith.constant 0 : i32
    return %c0_i32, %c0_i32_0, %c0_i32_1 : i32, i32, i32
  }
  func.func @transform_4(%arg0: i32) -> (i32, i32) {
    %c0_i32 = arith.constant 0 : i32
    %c0_i32_0 = arith.constant 0 : i32
    %c0_i32_1 = arith.constant 0 : i32
    return %c0_i32, %c0_i32_0 : i32, i32
  }
  func.func @transform_5(%arg0: i32) -> (i32, i32) {
    %c0_i32 = arith.constant 0 : i32
    %c0_i32_0 = arith.constant 0 : i32
    %c0_i32_1 = arith.constant 0 : i32
    return %c0_i32, %c0_i32_0 : i32, i32
  }
  func.func @transform_6(%arg0: i32) -> (i32, i32, i32) {
    %c0_i32 = arith.constant 0 : i32
    %c0_i32_0 = arith.constant 0 : i32
    %c0_i32_1 = arith.constant 0 : i32
    return %arg0, %c0_i32, %c0_i32_0 : i32, i32, i32
  }
}

</mosaic_0001>

<llo_original>
// kernel: double_conv.1
$region0: #{double_conv.1}
  #allocation0 [shape = 'u32[]', space=smem, size = 0x4, offset = 0x4, fixed_abs, tag = 'smem constant byte address 0x4 - core index']
  #allocation1 [shape = 'u32[72,128]{1,0:T(1,128)}', space=vmem, size = 0x9000, scoped, tag = 'internal scratch']
  %s0 = inlined_call_operand.vmem [shape: f32[2,4,256], index: 0, kind: input, shape index: {}]
  %s1 = inlined_call_operand.vmem [shape: f32[9,8,4], index: 1, kind: input, shape index: {}]
  %s2 = inlined_call_operand.vmem [shape: f32[8,1], index: 2, kind: input, shape index: {}]
  %s3 = inlined_call_operand.vmem [shape: f32[9,8,8], index: 3, kind: input, shape index: {}]
  %s4 = inlined_call_operand.vmem [shape: f32[8,1], index: 4, kind: input, shape index: {}]
  %s5 = inlined_call_operand.vmem [shape: f32[2,256], index: 5, kind: input, shape index: {}]
  %s6 = inlined_call_operand.vmem [shape: f32[2,8,256], index: 6, kind: output, shape index: {}]
  %s7 = sld [smem:[#allocation0]]
  $region34: #{double_conv.1} parent=0
    _
  %s9 = ssub.s32 1, %s7
  %s10 = scalar_select 0, %s9, %s7
  // Predicated region
  $region2: #{double_conv.1} parent=0 // pred_check
    _
  $region3: #{double_conv.1} parent=0 // pred_check_branch
    %12 = sbr.rel (0) target = $region5
  $region4: #{double_conv.1} parent=0 // pred_region
    _
  $region5: #{double_conv.1} parent=0 // pred_fallthru
    _
  // Predicated region
  $region6: #{double_conv.1} parent=0 // pred_check
    _
  $region7: #{double_conv.1} parent=0 // pred_check_branch
    %14 = sbr.rel (0) target = $region9
  $region8: #{double_conv.1} parent=0 // pred_region
    _
  $region9: #{double_conv.1} parent=0 // pred_fallthru
    _
  // Predicated region
  $region10: #{double_conv.1} parent=0 // pred_check
    _
  $region11: #{double_conv.1} parent=0 // pred_check_branch
    %16 = sbr.rel (0) target = $region13
  $region12: #{double_conv.1} parent=0 // pred_region
    _
  $region13: #{double_conv.1} parent=0 // pred_fallthru
    _
  // Predicated region
  $region14: #{double_conv.1} parent=0 // pred_check
    _
  $region15: #{double_conv.1} parent=0 // pred_check_branch
    %18 = sbr.rel (0) target = $region17
  $region16: #{double_conv.1} parent=0 // pred_region
    _
  $region17: #{double_conv.1} parent=0 // pred_fallthru
    _
  // Predicated region
  $region18: #{double_conv.1} parent=0 // pred_check
    _
  $region19: #{double_conv.1} parent=0 // pred_check_branch
    %20 = sbr.rel (0) target = $region21
  $region20: #{double_conv.1} parent=0 // pred_region
    _
  $region21: #{double_conv.1} parent=0 // pred_fallthru
    _
  // Predicated region
  $region22: #{double_conv.1} parent=0 // pred_check
    _
  $region23: #{double_conv.1} parent=0 // pred_check_branch
    %22 = sbr.rel (0) target = $region25
  $region24: #{double_conv.1} parent=0 // pred_region
    _
  $region25: #{double_conv.1} parent=0 // pred_fallthru
    _
  %v23 = vld [vmem:[%s1] sm:$0xff]
  %v24 = vld [vmem:[%s1 + $0x8] sm:$0xff]
  %v25 = vld [vmem:[%s1 + $0x10] sm:$0xff]
  %v26 = vld [vmem:[%s1 + $0x18] sm:$0xff]
  %v27 = vld [vmem:[%s1 + $0x20] sm:$0xff]
  %v28 = vld [vmem:[%s1 + $0x28] sm:$0xff]
  %v29 = vld [vmem:[%s1 + $0x30] sm:$0xff]
  %v30 = vld [vmem:[%s1 + $0x38] sm:$0xff]
  %v31 = vld [vmem:[%s1 + $0x40] sm:$0xff]
  %v32 = vld [vmem:[%s3] sm:$0xff]
  %v33 = vld [vmem:[%s3 + $0x8] sm:$0xff]
  %v34 = vld [vmem:[%s3 + $0x10] sm:$0xff]
  %v35 = vld [vmem:[%s3 + $0x18] sm:$0xff]
  %v36 = vld [vmem:[%s3 + $0x20] sm:$0xff]
  %v37 = vld [vmem:[%s3 + $0x28] sm:$0xff]
  %v38 = vld [vmem:[%s3 + $0x30] sm:$0xff]
  %v39 = vld [vmem:[%s3 + $0x38] sm:$0xff]
  %v40 = vld [vmem:[%s3 + $0x40] sm:$0xff]
  %v41 = vld [vmem:[%s2] sm:$0xff]
  %v42 = vld [vmem:[%s4] sm:$0xff]
  %v43 = vld [vmem:[%s5] sm:$0xf]
  %v44 = vld [vmem:[%s0] sm:$0xff]
  %46 = vst [vmem:[#allocation1] ss:$2 sm:$0xff] %v44
  %v47 = vld.sshfl [vmem:[#allocation1] sm:$0xff pattern:$0x75316420]
  %v48 = vld.sshfl [vmem:[#allocation1 + $0x8] sm:$0xff pattern:$0x75316420]
  %49 = vrot.lane.b32.xlu0 %v47, 17
  %v50 = vpop.permute.xlu0 %49
  %51 = vrot.lane.b32.xlu0 %v48, 17
  %v52 = vpop.permute.xlu0 %51
  %vm53 = vcmask 138240
  %v54 = vsel %vm53, %v50, %v52
  %v58 = vsel %vm53, 0.0, %v50
  %v59 = vsel %vm53, %v52, 0.0
  %v61 = vperm.slane %v43, 0
  %v62 = vperm.slane %v43, 2
  %v65 = vperm.slane %v61, 0
  %v66 = vperm.slane %v62, 0
  %v67 = vmul.f32 %v58, %v65
  %v68 = vmul.f32 %v54, %v66
  %71 = vrot.lane.b32.xlu0 %v58, 127
  %v72 = vpop.permute.xlu0 %71
  %73 = vrot.lane.b32.xlu0 %v54, 127
  %v74 = vpop.permute.xlu0 %73
  %75 = vrot.lane.b32.xlu0 %v59, 127
  %v76 = vpop.permute.xlu0 %75
  %vm77 = vcmask 1039360
  %v78 = vsel %vm77, %v72, %v74
  %v79 = vsel %vm77, %v74, %v76
  %vm80 = vcmask 31744
  %v82 = vsel %vm80, %v24, 0
  %vm84 = vcmask 1043456
  %v85 = vsel %vm84, %v78, 0
  %v87 = vsel %vm84, %v79, 0
  %89 = vmatpush.msra.mxu0 0.0
  %90 = vmatpush.msra.mxu0 0.0
  %91 = vmatpush.msra.mxu0 0.0
  %92 = vmatpush.msra.mxu0 0.0
  %93 = vmatpush.msra.mxu0 0.0
  %94 = vmatpush.msra.mxu0 0.0
  %95 = vmatpush.msra.mxu0 0.0
  %96 = vmatpush.msra.mxu0 0.0
  %97 = vmatpush.msra.mxu0 0.0
  %98 = vmatpush.msra.mxu0 0.0
  %99 = vmatpush.msra.mxu0 0.0
  %100 = vmatpush.msra.mxu0 0.0
  %101 = vmatpush.msra.mxu0 0.0
  %102 = vmatpush.msra.mxu0 0.0
  %103 = vmatpush.msra.mxu0 0.0
  %104 = vmatpush.msra.mxu0 %v85
  %105 = vmatmul.f32.gmra.mxu0 %v82
  %v106 = vpop.f32.mrf.mxu0
  %v107 = vadd.f32 0.0, %v106
  %108 = vdwg.mxu0
  %109 = vmatpush.msra.mxu0 0.0
  %110 = vmatpush.msra.mxu0 0.0
  %111 = vmatpush.msra.mxu0 0.0
  %112 = vmatpush.msra.mxu0 0.0
  %113 = vmatpush.msra.mxu0 0.0
  %114 = vmatpush.msra.mxu0 0.0
  %115 = vmatpush.msra.mxu0 0.0
  %116 = vmatpush.msra.mxu0 0.0
  %117 = vmatpush.msra.mxu0 0.0
  %118 = vmatpush.msra.mxu0 0.0
  %119 = vmatpush.msra.mxu0 0.0
  %120 = vmatpush.msra.mxu0 0.0
  %121 = vmatpush.msra.mxu0 0.0
  %122 = vmatpush.msra.mxu0 0.0
  %123 = vmatpush.msra.mxu0 0.0
  %124 = vmatpush.msra.mxu0 %v87
  %125 = vmatmul.f32.gmra.mxu0 %v82
  %v126 = vpop.f32.mrf.mxu0
  %v127 = vadd.f32 0.0, %v126
  %128 = vdwg.mxu0
  %v130 = vsel %vm80, %v23, 0
  %v133 = vsel %vm84, %v67, 0
  %v136 = vsel %vm84, %v68, 0
  %138 = vmatpush.msra.mxu0 0.0
  %139 = vmatpush.msra.mxu0 0.0
  %140 = vmatpush.msra.mxu0 0.0
  %141 = vmatpush.msra.mxu0 0.0
  %142 = vmatpush.msra.mxu0 0.0
  %143 = vmatpush.msra.mxu0 0.0
  %144 = vmatpush.msra.mxu0 0.0
  %145 = vmatpush.msra.mxu0 0.0
  %146 = vmatpush.msra.mxu0 0.0
  %147 = vmatpush.msra.mxu0 0.0
  %148 = vmatpush.msra.mxu0 0.0
  %149 = vmatpush.msra.mxu0 0.0
  %150 = vmatpush.msra.mxu0 0.0
  %151 = vmatpush.msra.mxu0 0.0
  %152 = vmatpush.msra.mxu0 0.0
  %153 = vmatpush.msra.mxu0 %v133
  %154 = vmatmul.f32.gmra.mxu0 %v130
  %v155 = vpop.f32.mrf.mxu0
  %v156 = vadd.f32 %v107, %v155
  %157 = vdwg.mxu0
  %158 = vmatpush.msra.mxu0 0.0
  %159 = vmatpush.msra.mxu0 0.0
  %160 = vmatpush.msra.mxu0 0.0
  %161 = vmatpush.msra.mxu0 0.0
  %162 = vmatpush.msra.mxu0 0.0
  %163 = vmatpush.msra.mxu0 0.0
  %164 = vmatpush.msra.mxu0 0.0
  %165 = vmatpush.msra.mxu0 0.0
  %166 = vmatpush.msra.mxu0 0.0
  %167 = vmatpush.msra.mxu0 0.0
  %168 = vmatpush.msra.mxu0 0.0
  %169 = vmatpush.msra.mxu0 0.0
  %170 = vmatpush.msra.mxu0 0.0
  %171 = vmatpush.msra.mxu0 0.0
  %172 = vmatpush.msra.mxu0 0.0
  %173 = vmatpush.msra.mxu0 %v136
  %174 = vmatmul.f32.gmra.mxu0 %v130
  %v175 = vpop.f32.mrf.mxu0
  %v176 = vadd.f32 %v127, %v175
  %177 = vdwg.mxu0
  %v178 = vperm.slane %v43, 1
  %v179 = vperm.slane %v43, 3
  %v182 = vperm.slane %v178, 1
  %v183 = vperm.slane %v179, 1
  %186 = vrot.lane.b32.xlu0 %v182, 2
  %v187 = vpop.permute.xlu0 %186
  %188 = vrot.lane.b32.xlu0 %v183, 2
  %v189 = vpop.permute.xlu0 %188
  %vm190 = vcmask 15360
  %v191 = vsel %vm190, %v187, %v189
  %v195 = vmul.f32 %v58, %v187
  %v196 = vmul.f32 %v54, %v191
  %v197 = vmul.f32 %v59, %v189
  %201 = vrot.lane.b32.xlu0 %v195, 126
  %v202 = vpop.permute.xlu0 %201
  %203 = vrot.lane.b32.xlu0 %v196, 126
  %v204 = vpop.permute.xlu0 %203
  %205 = vrot.lane.b32.xlu0 %v197, 126
  %v206 = vpop.permute.xlu0 %205
  %vm207 = vcmask 1031168
  %v208 = vsel %vm207, %v202, %v204
  %v209 = vsel %vm207, %v204, %v206
  %v211 = vsel %vm80, %v25, 0
  %v213 = vsel %vm84, %v208, 0
  %v215 = vsel %vm84, %v209, 0
  %217 = vmatpush.msra.mxu0 0.0
  %218 = vmatpush.msra.mxu0 0.0
  %219 = vmatpush.msra.mxu0 0.0
  %220 = vmatpush.msra.mxu0 0.0
  %221 = vmatpush.msra.mxu0 0.0
  %222 = vmatpush.msra.mxu0 0.0
  %223 = vmatpush.msra.mxu0 0.0
  %224 = vmatpush.msra.mxu0 0.0
  %225 = vmatpush.msra.mxu0 0.0
  %226 = vmatpush.msra.mxu0 0.0
  %227 = vmatpush.msra.mxu0 0.0
  %228 = vmatpush.msra.mxu0 0.0
  %229 = vmatpush.msra.mxu0 0.0
  %230 = vmatpush.msra.mxu0 0.0
  %231 = vmatpush.msra.mxu0 0.0
  %232 = vmatpush.msra.mxu0 %v213
  %233 = vmatmul.f32.gmra.mxu0 %v211
  %v234 = vpop.f32.mrf.mxu0
  %v235 = vadd.f32 0.0, %v234
  %236 = vdwg.mxu0
  %237 = vmatpush.msra.mxu0 0.0
  %238 = vmatpush.msra.mxu0 0.0
  %239 = vmatpush.msra.mxu0 0.0
  %240 = vmatpush.msra.mxu0 0.0
  %241 = vmatpush.msra.mxu0 0.0
  %242 = vmatpush.msra.mxu0 0.0
  %243 = vmatpush.msra.mxu0 0.0
  %244 = vmatpush.msra.mxu0 0.0
  %245 = vmatpush.msra.mxu0 0.0
  %246 = vmatpush.msra.mxu0 0.0
  %247 = vmatpush.msra.mxu0 0.0
  %248 = vmatpush.msra.mxu0 0.0
  %249 = vmatpush.msra.mxu0 0.0
  %250 = vmatpush.msra.mxu0 0.0
  %251 = vmatpush.msra.mxu0 0.0
  %252 = vmatpush.msra.mxu0 %v215
  %253 = vmatmul.f32.gmra.mxu0 %v211
  %v254 = vpop.f32.mrf.mxu0
  %v255 = vadd.f32 0.0, %v254
  %256 = vdwg.mxu0
  %v257 = vadd.f32 %v156, %v235
  %v258 = vadd.f32 %v176, %v255
  %261 = vrot.lane.b32.xlu0 %v65, 16
  %v262 = vpop.permute.xlu0 %261
  %263 = vrot.lane.b32.xlu0 %v66, 16
  %v264 = vpop.permute.xlu0 %263
  %vm265 = vcmask 130048
  %v266 = vsel %vm265, %v262, %v264
  %v270 = vmul.f32 %v58, %v262
  %v271 = vmul.f32 %v54, %v266
  %v272 = vmul.f32 %v59, %v264
  %276 = vrot.lane.b32.xlu0 %v270, 112
  %v277 = vpop.permute.xlu0 %276
  %278 = vrot.lane.b32.xlu0 %v271, 112
  %v279 = vpop.permute.xlu0 %278
  %280 = vrot.lane.b32.xlu0 %v272, 112
  %v281 = vpop.permute.xlu0 %280
  %vm282 = vcmask 916480
  %v283 = vsel %vm282, %v277, %v279
  %v284 = vsel %vm282, %v279, %v281
  %v286 = vsel %vm80, %v26, 0
  %v288 = vsel %vm84, %v283, 0
  %v290 = vsel %vm84, %v284, 0
  %292 = vmatpush.msra.mxu0 0.0
  %293 = vmatpush.msra.mxu0 0.0
  %294 = vmatpush.msra.mxu0 0.0
  %295 = vmatpush.msra.mxu0 0.0
  %296 = vmatpush.msra.mxu0 0.0
  %297 = vmatpush.msra.mxu0 0.0
  %298 = vmatpush.msra.mxu0 0.0
  %299 = vmatpush.msra.mxu0 0.0
  %300 = vmatpush.msra.mxu0 0.0
  %301 = vmatpush.msra.mxu0 0.0
  %302 = vmatpush.msra.mxu0 0.0
  %303 = vmatpush.msra.mxu0 0.0
  %304 = vmatpush.msra.mxu0 0.0
  %305 = vmatpush.msra.mxu0 0.0
  %306 = vmatpush.msra.mxu0 0.0
  %307 = vmatpush.msra.mxu0 %v288
  %308 = vmatmul.f32.gmra.mxu0 %v286
  %v309 = vpop.f32.mrf.mxu0
  %v310 = vadd.f32 0.0, %v309
  %311 = vdwg.mxu0
  %312 = vmatpush.msra.mxu0 0.0
  %313 = vmatpush.msra.mxu0 0.0
  %314 = vmatpush.msra.mxu0 0.0
  %315 = vmatpush.msra.mxu0 0.0
  %316 = vmatpush.msra.mxu0 0.0
  %317 = vmatpush.msra.mxu0 0.0
  %318 = vmatpush.msra.mxu0 0.0
  %319 = vmatpush.msra.mxu0 0.0
  %320 = vmatpush.msra.mxu0 0.0
  %321 = vmatpush.msra.mxu0 0.0
  %322 = vmatpush.msra.mxu0 0.0
  %323 = vmatpush.msra.mxu0 0.0
  %324 = vmatpush.msra.mxu0 0.0
  %325 = vmatpush.msra.mxu0 0.0
  %326 = vmatpush.msra.mxu0 0.0
  %327 = vmatpush.msra.mxu0 %v290
  %328 = vmatmul.f32.gmra.mxu0 %v286
  %v329 = vpop.f32.mrf.mxu0
  %v330 = vadd.f32 0.0, %v329
  %331 = vdwg.mxu0
  %v332 = vadd.f32 %v257, %v310
  %v333 = vadd.f32 %v258, %v330
  %334 = vrot.lane.b32.xlu0 %v58, 111
  %v335 = vpop.permute.xlu0 %334
  %336 = vrot.lane.b32.xlu0 %v54, 111
  %v337 = vpop.permute.xlu0 %336
  %338 = vrot.lane.b32.xlu0 %v59, 111
  %v339 = vpop.permute.xlu0 %338
  %vm340 = vcmask 908288
  %v341 = vsel %vm340, %v335, %v337
  %v342 = vsel %vm340, %v337, %v339
  %v344 = vsel %vm80, %v27, 0
  %v346 = vsel %vm84, %v341, 0
  %v348 = vsel %vm84, %v342, 0
  %350 = vmatpush.msra.mxu0 0.0
  %351 = vmatpush.msra.mxu0 0.0
  %352 = vmatpush.msra.mxu0 0.0
  %353 = vmatpush.msra.mxu0 0.0
  %354 = vmatpush.msra.mxu0 0.0
  %355 = vmatpush.msra.mxu0 0.0
  %356 = vmatpush.msra.mxu0 0.0
  %357 = vmatpush.msra.mxu0 0.0
  %358 = vmatpush.msra.mxu0 0.0
  %359 = vmatpush.msra.mxu0 0.0
  %360 = vmatpush.msra.mxu0 0.0
  %361 = vmatpush.msra.mxu0 0.0
  %362 = vmatpush.msra.mxu0 0.0
  %363 = vmatpush.msra.mxu0 0.0
  %364 = vmatpush.msra.mxu0 0.0
  %365 = vmatpush.msra.mxu0 %v346
  %366 = vmatmul.f32.gmra.mxu0 %v344
  %v367 = vpop.f32.mrf.mxu0
  %v368 = vadd.f32 0.0, %v367
  %369 = vdwg.mxu0
  %370 = vmatpush.msra.mxu0 0.0
  %371 = vmatpush.msra.mxu0 0.0
  %372 = vmatpush.msra.mxu0 0.0
  %373 = vmatpush.msra.mxu0 0.0
  %374 = vmatpush.msra.mxu0 0.0
  %375 = vmatpush.msra.mxu0 0.0
  %376 = vmatpush.msra.mxu0 0.0
  %377 = vmatpush.msra.mxu0 0.0
  %378 = vmatpush.msra.mxu0 0.0
  %379 = vmatpush.msra.mxu0 0.0
  %380 = vmatpush.msra.mxu0 0.0
  %381 = vmatpush.msra.mxu0 0.0
  %382 = vmatpush.msra.mxu0 0.0
  %383 = vmatpush.msra.mxu0 0.0
  %384 = vmatpush.msra.mxu0 0.0
  %385 = vmatpush.msra.mxu0 %v348
  %386 = vmatmul.f32.gmra.mxu0 %v344
  %v387 = vpop.f32.mrf.mxu0
  %v388 = vadd.f32 0.0, %v387
  %389 = vdwg.mxu0
  %v390 = vadd.f32 %v332, %v368
  %v391 = vadd.f32 %v333, %v388
  %392 = vrot.lane.b32.xlu0 %v182, 18
  %v393 = vpop.permute.xlu0 %392
  %394 = vrot.lane.b32.xlu0 %v183, 18
  %v395 = vpop.permute.xlu0 %394
  %vm396 = vcmask 146432
  %v397 = vsel %vm396, %v393, %v395
  %v401 = vmul.f32 %v58, %v393
  %v402 = vmul.f32 %v54, %v397
  %v403 = vmul.f32 %v59, %v395
  %407 = vrot.lane.b32.xlu0 %v401, 110
  %v408 = vpop.permute.xlu0 %407
  %409 = vrot.lane.b32.xlu0 %v402, 110
  %v410 = vpop.permute.xlu0 %409
  %411 = vrot.lane.b32.xlu0 %v403, 110
  %v412 = vpop.permute.xlu0 %411
  %vm413 = vcmask 900096
  %v414 = vsel %vm413, %v408, %v410
  %v415 = vsel %vm413, %v410, %v412
  %v417 = vsel %vm80, %v28, 0
  %v419 = vsel %vm84, %v414, 0
  %v421 = vsel %vm84, %v415, 0
  %423 = vmatpush.msra.mxu0 0.0
  %424 = vmatpush.msra.mxu0 0.0
  %425 = vmatpush.msra.mxu0 0.0
  %426 = vmatpush.msra.mxu0 0.0
  %427 = vmatpush.msra.mxu0 0.0
  %428 = vmatpush.msra.mxu0 0.0
  %429 = vmatpush.msra.mxu0 0.0
  %430 = vmatpush.msra.mxu0 0.0
  %431 = vmatpush.msra.mxu0 0.0
  %432 = vmatpush.msra.mxu0 0.0
  %433 = vmatpush.msra.mxu0 0.0
  %434 = vmatpush.msra.mxu0 0.0
  %435 = vmatpush.msra.mxu0 0.0
  %436 = vmatpush.msra.mxu0 0.0
  %437 = vmatpush.msra.mxu0 0.0
  %438 = vmatpush.msra.mxu0 %v419
  %439 = vmatmul.f32.gmra.mxu0 %v417
  %v440 = vpop.f32.mrf.mxu0
  %v441 = vadd.f32 0.0, %v440
  %442 = vdwg.mxu0
  %443 = vmatpush.msra.mxu0 0.0
  %444 = vmatpush.msra.mxu0 0.0
  %445 = vmatpush.msra.mxu0 0.0
  %446 = vmatpush.msra.mxu0 0.0
  %447 = vmatpush.msra.mxu0 0.0
  %448 = vmatpush.msra.mxu0 0.0
  %449 = vmatpush.msra.mxu0 0.0
  %450 = vmatpush.msra.mxu0 0.0
  %451 = vmatpush.msra.mxu0 0.0
  %452 = vmatpush.msra.mxu0 0.0
  %453 = vmatpush.msra.mxu0 0.0
  %454 = vmatpush.msra.mxu0 0.0
  %455 = vmatpush.msra.mxu0 0.0
  %456 = vmatpush.msra.mxu0 0.0
  %457 = vmatpush.msra.mxu0 0.0
  %458 = vmatpush.msra.mxu0 %v421
  %459 = vmatmul.f32.gmra.mxu0 %v417
  %v460 = vpop.f32.mrf.mxu0
  %v461 = vadd.f32 0.0, %v460
  %462 = vdwg.mxu0
  %v463 = vadd.f32 %v390, %v441
  %v464 = vadd.f32 %v391, %v461
  %465 = vrot.lane.b32.xlu0 %v65, 32
  %v466 = vpop.permute.xlu0 %465
  %467 = vrot.lane.b32.xlu0 %v66, 32
  %v468 = vpop.permute.xlu0 %467
  %vm469 = vcmask 261120
  %v470 = vsel %vm469, %v466, %v468
  %v474 = vmul.f32 %v58, %v466
  %v475 = vmul.f32 %v54, %v470
  %v476 = vmul.f32 %v59, %v468
  %480 = vrot.lane.b32.xlu0 %v474, 96
  %v481 = vpop.permute.xlu0 %480
  %482 = vrot.lane.b32.xlu0 %v475, 96
  %v483 = vpop.permute.xlu0 %482
  %484 = vrot.lane.b32.xlu0 %v476, 96
  %v485 = vpop.permute.xlu0 %484
  %vm486 = vcmask 785408
  %v487 = vsel %vm486, %v481, %v483
  %v488 = vsel %vm486, %v483, %v485
  %v490 = vsel %vm80, %v29, 0
  %v492 = vsel %vm84, %v487, 0
  %v494 = vsel %vm84, %v488, 0
  %496 = vmatpush.msra.mxu0 0.0
  %497 = vmatpush.msra.mxu0 0.0
  %498 = vmatpush.msra.mxu0 0.0
  %499 = vmatpush.msra.mxu0 0.0
  %500 = vmatpush.msra.mxu0 0.0
  %501 = vmatpush.msra.mxu0 0.0
  %502 = vmatpush.msra.mxu0 0.0
  %503 = vmatpush.msra.mxu0 0.0
  %504 = vmatpush.msra.mxu0 0.0
  %505 = vmatpush.msra.mxu0 0.0
  %506 = vmatpush.msra.mxu0 0.0
  %507 = vmatpush.msra.mxu0 0.0
  %508 = vmatpush.msra.mxu0 0.0
  %509 = vmatpush.msra.mxu0 0.0
  %510 = vmatpush.msra.mxu0 0.0
  %511 = vmatpush.msra.mxu0 %v492
  %512 = vmatmul.f32.gmra.mxu0 %v490
  %v513 = vpop.f32.mrf.mxu0
  %v514 = vadd.f32 0.0, %v513
  %515 = vdwg.mxu0
  %516 = vmatpush.msra.mxu0 0.0
  %517 = vmatpush.msra.mxu0 0.0
  %518 = vmatpush.msra.mxu0 0.0
  %519 = vmatpush.msra.mxu0 0.0
  %520 = vmatpush.msra.mxu0 0.0
  %521 = vmatpush.msra.mxu0 0.0
  %522 = vmatpush.msra.mxu0 0.0
  %523 = vmatpush.msra.mxu0 0.0
  %524 = vmatpush.msra.mxu0 0.0
  %525 = vmatpush.msra.mxu0 0.0
  %526 = vmatpush.msra.mxu0 0.0
  %527 = vmatpush.msra.mxu0 0.0
  %528 = vmatpush.msra.mxu0 0.0
  %529 = vmatpush.msra.mxu0 0.0
  %530 = vmatpush.msra.mxu0 0.0
  %531 = vmatpush.msra.mxu0 %v494
  %532 = vmatmul.f32.gmra.mxu0 %v490
  %v533 = vpop.f32.mrf.mxu0
  %v534 = vadd.f32 0.0, %v533
  %535 = vdwg.mxu0
  %v536 = vadd.f32 %v463, %v514
  %v537 = vadd.f32 %v464, %v534
  %538 = vrot.lane.b32.xlu0 %v58, 95
  %v539 = vpop.permute.xlu0 %538
  %540 = vrot.lane.b32.xlu0 %v54, 95
  %v541 = vpop.permute.xlu0 %540
  %542 = vrot.lane.b32.xlu0 %v59, 95
  %v543 = vpop.permute.xlu0 %542
  %vm544 = vcmask 777216
  %v545 = vsel %vm544, %v539, %v541
  %v546 = vsel %vm544, %v541, %v543
  %v548 = vsel %vm80, %v30, 0
  %v550 = vsel %vm84, %v545, 0
  %v552 = vsel %vm84, %v546, 0
  %554 = vmatpush.msra.mxu0 0.0
  %555 = vmatpush.msra.mxu0 0.0
  %556 = vmatpush.msra.mxu0 0.0
  %557 = vmatpush.msra.mxu0 0.0
  %558 = vmatpush.msra.mxu0 0.0
  %559 = vmatpush.msra.mxu0 0.0
  %560 = vmatpush.msra.mxu0 0.0
  %561 = vmatpush.msra.mxu0 0.0
  %562 = vmatpush.msra.mxu0 0.0
  %563 = vmatpush.msra.mxu0 0.0
  %564 = vmatpush.msra.mxu0 0.0
  %565 = vmatpush.msra.mxu0 0.0
  %566 = vmatpush.msra.mxu0 0.0
  %567 = vmatpush.msra.mxu0 0.0
  %568 = vmatpush.msra.mxu0 0.0
  %569 = vmatpush.msra.mxu0 %v550
  %570 = vmatmul.f32.gmra.mxu0 %v548
  %v571 = vpop.f32.mrf.mxu0
  %v572 = vadd.f32 0.0, %v571
  %573 = vdwg.mxu0
  %574 = vmatpush.msra.mxu0 0.0
  %575 = vmatpush.msra.mxu0 0.0
  %576 = vmatpush.msra.mxu0 0.0
  %577 = vmatpush.msra.mxu0 0.0
  %578 = vmatpush.msra.mxu0 0.0
  %579 = vmatpush.msra.mxu0 0.0
  %580 = vmatpush.msra.mxu0 0.0
  %581 = vmatpush.msra.mxu0 0.0
  %582 = vmatpush.msra.mxu0 0.0
  %583 = vmatpush.msra.mxu0 0.0
  %584 = vmatpush.msra.mxu0 0.0
  %585 = vmatpush.msra.mxu0 0.0
  %586 = vmatpush.msra.mxu0 0.0
  %587 = vmatpush.msra.mxu0 0.0
  %588 = vmatpush.msra.mxu0 0.0
  %589 = vmatpush.msra.mxu0 %v552
  %590 = vmatmul.f32.gmra.mxu0 %v548
  %v591 = vpop.f32.mrf.mxu0
  %v592 = vadd.f32 0.0, %v591
  %593 = vdwg.mxu0
  %v594 = vadd.f32 %v536, %v572
  %v595 = vadd.f32 %v537, %v592
  %596 = vrot.lane.b32.xlu0 %v182, 34
  %v597 = vpop.permute.xlu0 %596
  %598 = vrot.lane.b32.xlu0 %v183, 34
  %v599 = vpop.permute.xlu0 %598
  %vm600 = vcmask 277504
  %v601 = vsel %vm600, %v597, %v599
  %v605 = vmul.f32 %v58, %v597
  %v606 = vmul.f32 %v54, %v601
  %v607 = vmul.f32 %v59, %v599
  %611 = vrot.lane.b32.xlu0 %v605, 94
  %v612 = vpop.permute.xlu0 %611
  %613 = vrot.lane.b32.xlu0 %v606, 94
  %v614 = vpop.permute.xlu0 %613
  %615 = vrot.lane.b32.xlu0 %v607, 94
  %v616 = vpop.permute.xlu0 %615
  %vm617 = vcmask 769024
  %v618 = vsel %vm617, %v612, %v614
  %v619 = vsel %vm617, %v614, %v616
  %v621 = vsel %vm80, %v31, 0
  %v623 = vsel %vm84, %v618, 0
  %v625 = vsel %vm84, %v619, 0
  %627 = vmatpush.msra.mxu0 0.0
  %628 = vmatpush.msra.mxu0 0.0
  %629 = vmatpush.msra.mxu0 0.0
  %630 = vmatpush.msra.mxu0 0.0
  %631 = vmatpush.msra.mxu0 0.0
  %632 = vmatpush.msra.mxu0 0.0
  %633 = vmatpush.msra.mxu0 0.0
  %634 = vmatpush.msra.mxu0 0.0
  %635 = vmatpush.msra.mxu0 0.0
  %636 = vmatpush.msra.mxu0 0.0
  %637 = vmatpush.msra.mxu0 0.0
  %638 = vmatpush.msra.mxu0 0.0
  %639 = vmatpush.msra.mxu0 0.0
  %640 = vmatpush.msra.mxu0 0.0
  %641 = vmatpush.msra.mxu0 0.0
  %642 = vmatpush.msra.mxu0 %v623
  %643 = vmatmul.f32.gmra.mxu0 %v621
  %v644 = vpop.f32.mrf.mxu0
  %v645 = vadd.f32 0.0, %v644
  %646 = vdwg.mxu0
  %647 = vmatpush.msra.mxu0 0.0
  %648 = vmatpush.msra.mxu0 0.0
  %649 = vmatpush.msra.mxu0 0.0
  %650 = vmatpush.msra.mxu0 0.0
  %651 = vmatpush.msra.mxu0 0.0
  %652 = vmatpush.msra.mxu0 0.0
  %653 = vmatpush.msra.mxu0 0.0
  %654 = vmatpush.msra.mxu0 0.0
  %655 = vmatpush.msra.mxu0 0.0
  %656 = vmatpush.msra.mxu0 0.0
  %657 = vmatpush.msra.mxu0 0.0
  %658 = vmatpush.msra.mxu0 0.0
  %659 = vmatpush.msra.mxu0 0.0
  %660 = vmatpush.msra.mxu0 0.0
  %661 = vmatpush.msra.mxu0 0.0
  %662 = vmatpush.msra.mxu0 %v625
  %663 = vmatmul.f32.gmra.mxu0 %v621
  %v664 = vpop.f32.mrf.mxu0
  %v665 = vadd.f32 0.0, %v664
  %666 = vdwg.mxu0
  %v667 = vadd.f32 %v594, %v645
  %v668 = vadd.f32 %v595, %v665
  %670 = vset.pattern.permute.xlu0 0
  %671 = vperm.xlu0 %670, %v41
  %v672 = vpop.permute.xlu0 %671
  %v674 = vadd.f32 %v667, %v672
  %v675 = vadd.f32 %v668, %v672
  %v676 = vmax.f32 %v674, 0.0
  %v677 = vmax.f32 %v675, 0.0
  %680 = vrot.lane.b32.xlu0 %v676, 17
  %v681 = vpop.permute.xlu0 %680
  %682 = vrot.lane.b32.xlu0 %v677, 17
  %v683 = vpop.permute.xlu0 %682
  %v684 = vsel %vm53, %v681, %v683
  %v688 = vsel %vm53, 0.0, %v681
  %v689 = vsel %vm53, %v683, 0.0
  %v690 = vmul.f32 %v688, %v65
  %v691 = vmul.f32 %v684, %v66
  %694 = vrot.lane.b32.xlu0 %v688, 127
  %v695 = vpop.permute.xlu0 %694
  %696 = vrot.lane.b32.xlu0 %v684, 127
  %v697 = vpop.permute.xlu0 %696
  %698 = vrot.lane.b32.xlu0 %v689, 127
  %v699 = vpop.permute.xlu0 %698
  %v700 = vsel %vm77, %v695, %v697
  %v701 = vsel %vm77, %v697, %v699
  %vm704 = vcmask 64512
  %v706 = vsel %vm704, %v33, 0
  %708 = vmatpush.msra.mxu0 0.0
  %709 = vmatpush.msra.mxu0 0.0
  %710 = vmatpush.msra.mxu0 0.0
  %711 = vmatpush.msra.mxu0 0.0
  %712 = vmatpush.msra.mxu0 0.0
  %713 = vmatpush.msra.mxu0 0.0
  %714 = vmatpush.msra.mxu0 0.0
  %715 = vmatpush.msra.mxu0 0.0
  %716 = vmatpush.msra.mxu0 0.0
  %717 = vmatpush.msra.mxu0 0.0
  %718 = vmatpush.msra.mxu0 0.0
  %719 = vmatpush.msra.mxu0 0.0
  %720 = vmatpush.msra.mxu0 0.0
  %721 = vmatpush.msra.mxu0 0.0
  %722 = vmatpush.msra.mxu0 0.0
  %723 = vmatpush.msra.mxu0 %v700
  %724 = vmatmul.f32.gmra.mxu0 %v706
  %v725 = vpop.f32.mrf.mxu0
  %v726 = vadd.f32 0.0, %v725
  %727 = vdwg.mxu0
  %728 = vmatpush.msra.mxu0 0.0
  %729 = vmatpush.msra.mxu0 0.0
  %730 = vmatpush.msra.mxu0 0.0
  %731 = vmatpush.msra.mxu0 0.0
  %732 = vmatpush.msra.mxu0 0.0
  %733 = vmatpush.msra.mxu0 0.0
  %734 = vmatpush.msra.mxu0 0.0
  %735 = vmatpush.msra.mxu0 0.0
  %736 = vmatpush.msra.mxu0 0.0
  %737 = vmatpush.msra.mxu0 0.0
  %738 = vmatpush.msra.mxu0 0.0
  %739 = vmatpush.msra.mxu0 0.0
  %740 = vmatpush.msra.mxu0 0.0
  %741 = vmatpush.msra.mxu0 0.0
  %742 = vmatpush.msra.mxu0 0.0
  %743 = vmatpush.msra.mxu0 %v701
  %744 = vmatmul.f32.gmra.mxu0 %v706
  %v745 = vpop.f32.mrf.mxu0
  %v746 = vadd.f32 0.0, %v745
  %747 = vdwg.mxu0
  %v749 = vsel %vm704, %v32, 0
  %751 = vmatpush.msra.mxu0 0.0
  %752 = vmatpush.msra.mxu0 0.0
  %753 = vmatpush.msra.mxu0 0.0
  %754 = vmatpush.msra.mxu0 0.0
  %755 = vmatpush.msra.mxu0 0.0
  %756 = vmatpush.msra.mxu0 0.0
  %757 = vmatpush.msra.mxu0 0.0
  %758 = vmatpush.msra.mxu0 0.0
  %759 = vmatpush.msra.mxu0 0.0
  %760 = vmatpush.msra.mxu0 0.0
  %761 = vmatpush.msra.mxu0 0.0
  %762 = vmatpush.msra.mxu0 0.0
  %763 = vmatpush.msra.mxu0 0.0
  %764 = vmatpush.msra.mxu0 0.0
  %765 = vmatpush.msra.mxu0 0.0
  %766 = vmatpush.msra.mxu0 %v690
  %767 = vmatmul.f32.gmra.mxu0 %v749
  %v768 = vpop.f32.mrf.mxu0
  %v769 = vadd.f32 %v726, %v768
  %770 = vdwg.mxu0
  %771 = vmatpush.msra.mxu0 0.0
  %772 = vmatpush.msra.mxu0 0.0
  %773 = vmatpush.msra.mxu0 0.0
  %774 = vmatpush.msra.mxu0 0.0
  %775 = vmatpush.msra.mxu0 0.0
  %776 = vmatpush.msra.mxu0 0.0
  %777 = vmatpush.msra.mxu0 0.0
  %778 = vmatpush.msra.mxu0 0.0
  %779 = vmatpush.msra.mxu0 0.0
  %780 = vmatpush.msra.mxu0 0.0
  %781 = vmatpush.msra.mxu0 0.0
  %782 = vmatpush.msra.mxu0 0.0
  %783 = vmatpush.msra.mxu0 0.0
  %784 = vmatpush.msra.mxu0 0.0
  %785 = vmatpush.msra.mxu0 0.0
  %786 = vmatpush.msra.mxu0 %v691
  %787 = vmatmul.f32.gmra.mxu0 %v749
  %v788 = vpop.f32.mrf.mxu0
  %v789 = vadd.f32 %v746, %v788
  %790 = vdwg.mxu0
  %v791 = vmul.f32 %v688, %v187
  %v792 = vmul.f32 %v684, %v191
  %v793 = vmul.f32 %v689, %v189
  %797 = vrot.lane.b32.xlu0 %v791, 126
  %v798 = vpop.permute.xlu0 %797
  %799 = vrot.lane.b32.xlu0 %v792, 126
  %v800 = vpop.permute.xlu0 %799
  %801 = vrot.lane.b32.xlu0 %v793, 126
  %v802 = vpop.permute.xlu0 %801
  %v803 = vsel %vm207, %v798, %v800
  %v804 = vsel %vm207, %v800, %v802
  %v808 = vsel %vm704, %v34, 0
  %810 = vmatpush.msra.mxu0 0.0
  %811 = vmatpush.msra.mxu0 0.0
  %812 = vmatpush.msra.mxu0 0.0
  %813 = vmatpush.msra.mxu0 0.0
  %814 = vmatpush.msra.mxu0 0.0
  %815 = vmatpush.msra.mxu0 0.0
  %816 = vmatpush.msra.mxu0 0.0
  %817 = vmatpush.msra.mxu0 0.0
  %818 = vmatpush.msra.mxu0 0.0
  %819 = vmatpush.msra.mxu0 0.0
  %820 = vmatpush.msra.mxu0 0.0
  %821 = vmatpush.msra.mxu0 0.0
  %822 = vmatpush.msra.mxu0 0.0
  %823 = vmatpush.msra.mxu0 0.0
  %824 = vmatpush.msra.mxu0 0.0
  %825 = vmatpush.msra.mxu0 %v803
  %826 = vmatmul.f32.gmra.mxu0 %v808
  %v827 = vpop.f32.mrf.mxu0
  %v828 = vadd.f32 0.0, %v827
  %829 = vdwg.mxu0
  %830 = vmatpush.msra.mxu0 0.0
  %831 = vmatpush.msra.mxu0 0.0
  %832 = vmatpush.msra.mxu0 0.0
  %833 = vmatpush.msra.mxu0 0.0
  %834 = vmatpush.msra.mxu0 0.0
  %835 = vmatpush.msra.mxu0 0.0
  %836 = vmatpush.msra.mxu0 0.0
  %837 = vmatpush.msra.mxu0 0.0
  %838 = vmatpush.msra.mxu0 0.0
  %839 = vmatpush.msra.mxu0 0.0
  %840 = vmatpush.msra.mxu0 0.0
  %841 = vmatpush.msra.mxu0 0.0
  %842 = vmatpush.msra.mxu0 0.0
  %843 = vmatpush.msra.mxu0 0.0
  %844 = vmatpush.msra.mxu0 0.0
  %845 = vmatpush.msra.mxu0 %v804
  %846 = vmatmul.f32.gmra.mxu0 %v808
  %v847 = vpop.f32.mrf.mxu0
  %v848 = vadd.f32 0.0, %v847
  %849 = vdwg.mxu0
  %v850 = vadd.f32 %v769, %v828
  %v851 = vadd.f32 %v789, %v848
  %v852 = vmul.f32 %v688, %v262
  %v853 = vmul.f32 %v684, %v266
  %v854 = vmul.f32 %v689, %v264
  %858 = vrot.lane.b32.xlu0 %v852, 112
  %v859 = vpop.permute.xlu0 %858
  %860 = vrot.lane.b32.xlu0 %v853, 112
  %v861 = vpop.permute.xlu0 %860
  %862 = vrot.lane.b32.xlu0 %v854, 112
  %v863 = vpop.permute.xlu0 %862
  %v864 = vsel %vm282, %v859, %v861
  %v865 = vsel %vm282, %v861, %v863
  %v869 = vsel %vm704, %v35, 0
  %871 = vmatpush.msra.mxu0 0.0
  %872 = vmatpush.msra.mxu0 0.0
  %873 = vmatpush.msra.mxu0 0.0
  %874 = vmatpush.msra.mxu0 0.0
  %875 = vmatpush.msra.mxu0 0.0
  %876 = vmatpush.msra.mxu0 0.0
  %877 = vmatpush.msra.mxu0 0.0
  %878 = vmatpush.msra.mxu0 0.0
  %879 = vmatpush.msra.mxu0 0.0
  %880 = vmatpush.msra.mxu0 0.0
  %881 = vmatpush.msra.mxu0 0.0
  %882 = vmatpush.msra.mxu0 0.0
  %883 = vmatpush.msra.mxu0 0.0
  %884 = vmatpush.msra.mxu0 0.0
  %885 = vmatpush.msra.mxu0 0.0
  %886 = vmatpush.msra.mxu0 %v864
  %887 = vmatmul.f32.gmra.mxu0 %v869
  %v888 = vpop.f32.mrf.mxu0
  %v889 = vadd.f32 0.0, %v888
  %890 = vdwg.mxu0
  %891 = vmatpush.msra.mxu0 0.0
  %892 = vmatpush.msra.mxu0 0.0
  %893 = vmatpush.msra.mxu0 0.0
  %894 = vmatpush.msra.mxu0 0.0
  %895 = vmatpush.msra.mxu0 0.0
  %896 = vmatpush.msra.mxu0 0.0
  %897 = vmatpush.msra.mxu0 0.0
  %898 = vmatpush.msra.mxu0 0.0
  %899 = vmatpush.msra.mxu0 0.0
  %900 = vmatpush.msra.mxu0 0.0
  %901 = vmatpush.msra.mxu0 0.0
  %902 = vmatpush.msra.mxu0 0.0
  %903 = vmatpush.msra.mxu0 0.0
  %904 = vmatpush.msra.mxu0 0.0
  %905 = vmatpush.msra.mxu0 0.0
  %906 = vmatpush.msra.mxu0 %v865
  %907 = vmatmul.f32.gmra.mxu0 %v869
  %v908 = vpop.f32.mrf.mxu0
  %v909 = vadd.f32 0.0, %v908
  %910 = vdwg.mxu0
  %v911 = vadd.f32 %v850, %v889
  %v912 = vadd.f32 %v851, %v909
  %913 = vrot.lane.b32.xlu0 %v688, 111
  %v914 = vpop.permute.xlu0 %913
  %915 = vrot.lane.b32.xlu0 %v684, 111
  %v916 = vpop.permute.xlu0 %915
  %917 = vrot.lane.b32.xlu0 %v689, 111
  %v918 = vpop.permute.xlu0 %917
  %v919 = vsel %vm340, %v914, %v916
  %v920 = vsel %vm340, %v916, %v918
  %v924 = vsel %vm704, %v36, 0
  %926 = vmatpush.msra.mxu0 0.0
  %927 = vmatpush.msra.mxu0 0.0
  %928 = vmatpush.msra.mxu0 0.0
  %929 = vmatpush.msra.mxu0 0.0
  %930 = vmatpush.msra.mxu0 0.0
  %931 = vmatpush.msra.mxu0 0.0
  %932 = vmatpush.msra.mxu0 0.0
  %933 = vmatpush.msra.mxu0 0.0
  %934 = vmatpush.msra.mxu0 0.0
  %935 = vmatpush.msra.mxu0 0.0
  %936 = vmatpush.msra.mxu0 0.0
  %937 = vmatpush.msra.mxu0 0.0
  %938 = vmatpush.msra.mxu0 0.0
  %939 = vmatpush.msra.mxu0 0.0
  %940 = vmatpush.msra.mxu0 0.0
  %941 = vmatpush.msra.mxu0 %v919
  %942 = vmatmul.f32.gmra.mxu0 %v924
  %v943 = vpop.f32.mrf.mxu0
  %v944 = vadd.f32 0.0, %v943
  %945 = vdwg.mxu0
  %946 = vmatpush.msra.mxu0 0.0
  %947 = vmatpush.msra.mxu0 0.0
  %948 = vmatpush.msra.mxu0 0.0
  %949 = vmatpush.msra.mxu0 0.0
  %950 = vmatpush.msra.mxu0 0.0
  %951 = vmatpush.msra.mxu0 0.0
  %952 = vmatpush.msra.mxu0 0.0
  %953 = vmatpush.msra.mxu0 0.0
  %954 = vmatpush.msra.mxu0 0.0
  %955 = vmatpush.msra.mxu0 0.0
  %956 = vmatpush.msra.mxu0 0.0
  %957 = vmatpush.msra.mxu0 0.0
  %958 = vmatpush.msra.mxu0 0.0
  %959 = vmatpush.msra.mxu0 0.0
  %960 = vmatpush.msra.mxu0 0.0
  %961 = vmatpush.msra.mxu0 %v920
  %962 = vmatmul.f32.gmra.mxu0 %v924
  %v963 = vpop.f32.mrf.mxu0
  %v964 = vadd.f32 0.0, %v963
  %965 = vdwg.mxu0
  %v966 = vadd.f32 %v911, %v944
  %v967 = vadd.f32 %v912, %v964
  %v968 = vmul.f32 %v688, %v393
  %v969 = vmul.f32 %v684, %v397
  %v970 = vmul.f32 %v689, %v395
  %974 = vrot.lane.b32.xlu0 %v968, 110
  %v975 = vpop.permute.xlu0 %974
  %976 = vrot.lane.b32.xlu0 %v969, 110
  %v977 = vpop.permute.xlu0 %976
  %978 = vrot.lane.b32.xlu0 %v970, 110
  %v979 = vpop.permute.xlu0 %978
  %v980 = vsel %vm413, %v975, %v977
  %v981 = vsel %vm413, %v977, %v979
  %v985 = vsel %vm704, %v37, 0
  %987 = vmatpush.msra.mxu0 0.0
  %988 = vmatpush.msra.mxu0 0.0
  %989 = vmatpush.msra.mxu0 0.0
  %990 = vmatpush.msra.mxu0 0.0
  %991 = vmatpush.msra.mxu0 0.0
  %992 = vmatpush.msra.mxu0 0.0
  %993 = vmatpush.msra.mxu0 0.0
  %994 = vmatpush.msra.mxu0 0.0
  %995 = vmatpush.msra.mxu0 0.0
  %996 = vmatpush.msra.mxu0 0.0
  %997 = vmatpush.msra.mxu0 0.0
  %998 = vmatpush.msra.mxu0 0.0
  %999 = vmatpush.msra.mxu0 0.0
  %1000 = vmatpush.msra.mxu0 0.0
  %1001 = vmatpush.msra.mxu0 0.0
  %1002 = vmatpush.msra.mxu0 %v980
  %1003 = vmatmul.f32.gmra.mxu0 %v985
  %v1004 = vpop.f32.mrf.mxu0
  %v1005 = vadd.f32 0.0, %v1004
  %1006 = vdwg.mxu0
  %1007 = vmatpush.msra.mxu0 0.0
  %1008 = vmatpush.msra.mxu0 0.0
  %1009 = vmatpush.msra.mxu0 0.0
  %1010 = vmatpush.msra.mxu0 0.0
  %1011 = vmatpush.msra.mxu0 0.0
  %1012 = vmatpush.msra.mxu0 0.0
  %1013 = vmatpush.msra.mxu0 0.0
  %1014 = vmatpush.msra.mxu0 0.0
  %1015 = vmatpush.msra.mxu0 0.0
  %1016 = vmatpush.msra.mxu0 0.0
  %1017 = vmatpush.msra.mxu0 0.0
  %1018 = vmatpush.msra.mxu0 0.0
  %1019 = vmatpush.msra.mxu0 0.0
  %1020 = vmatpush.msra.mxu0 0.0
  %1021 = vmatpush.msra.mxu0 0.0
  %1022 = vmatpush.msra.mxu0 %v981
  %1023 = vmatmul.f32.gmra.mxu0 %v985
  %v1024 = vpop.f32.mrf.mxu0
  %v1025 = vadd.f32 0.0, %v1024
  %1026 = vdwg.mxu0
  %v1027 = vadd.f32 %v966, %v1005
  %v1028 = vadd.f32 %v967, %v1025
  %v1029 = vmul.f32 %v688, %v466
  %v1030 = vmul.f32 %v684, %v470
  %v1031 = vmul.f32 %v689, %v468
  %1035 = vrot.lane.b32.xlu0 %v1029, 96
  %v1036 = vpop.permute.xlu0 %1035
  %1037 = vrot.lane.b32.xlu0 %v1030, 96
  %v1038 = vpop.permute.xlu0 %1037
  %1039 = vrot.lane.b32.xlu0 %v1031, 96
  %v1040 = vpop.permute.xlu0 %1039
  %v1041 = vsel %vm486, %v1036, %v1038
  %v1042 = vsel %vm486, %v1038, %v1040
  %v1046 = vsel %vm704, %v38, 0
  %1048 = vmatpush.msra.mxu0 0.0
  %1049 = vmatpush.msra.mxu0 0.0
  %1050 = vmatpush.msra.mxu0 0.0
  %1051 = vmatpush.msra.mxu0 0.0
  %1052 = vmatpush.msra.mxu0 0.0
  %1053 = vmatpush.msra.mxu0 0.0
  %1054 = vmatpush.msra.mxu0 0.0
  %1055 = vmatpush.msra.mxu0 0.0
  %1056 = vmatpush.msra.mxu0 0.0
  %1057 = vmatpush.msra.mxu0 0.0
  %1058 = vmatpush.msra.mxu0 0.0
  %1059 = vmatpush.msra.mxu0 0.0
  %1060 = vmatpush.msra.mxu0 0.0
  %1061 = vmatpush.msra.mxu0 0.0
  %1062 = vmatpush.msra.mxu0 0.0
  %1063 = vmatpush.msra.mxu0 %v1041
  %1064 = vmatmul.f32.gmra.mxu0 %v1046
  %v1065 = vpop.f32.mrf.mxu0
  %v1066 = vadd.f32 0.0, %v1065
  %1067 = vdwg.mxu0
  %1068 = vmatpush.msra.mxu0 0.0
  %1069 = vmatpush.msra.mxu0 0.0
  %1070 = vmatpush.msra.mxu0 0.0
  %1071 = vmatpush.msra.mxu0 0.0
  %1072 = vmatpush.msra.mxu0 0.0
  %1073 = vmatpush.msra.mxu0 0.0
  %1074 = vmatpush.msra.mxu0 0.0
  %1075 = vmatpush.msra.mxu0 0.0
  %1076 = vmatpush.msra.mxu0 0.0
  %1077 = vmatpush.msra.mxu0 0.0
  %1078 = vmatpush.msra.mxu0 0.0
  %1079 = vmatpush.msra.mxu0 0.0
  %1080 = vmatpush.msra.mxu0 0.0
  %1081 = vmatpush.msra.mxu0 0.0
  %1082 = vmatpush.msra.mxu0 0.0
  %1083 = vmatpush.msra.mxu0 %v1042
  %1084 = vmatmul.f32.gmra.mxu0 %v1046
  %v1085 = vpop.f32.mrf.mxu0
  %v1086 = vadd.f32 0.0, %v1085
  %1087 = vdwg.mxu0
  %v1088 = vadd.f32 %v1027, %v1066
  %v1089 = vadd.f32 %v1028, %v1086
  %1090 = vrot.lane.b32.xlu0 %v688, 95
  %v1091 = vpop.permute.xlu0 %1090
  %1092 = vrot.lane.b32.xlu0 %v684, 95
  %v1093 = vpop.permute.xlu0 %1092
  %1094 = vrot.lane.b32.xlu0 %v689, 95
  %v1095 = vpop.permute.xlu0 %1094
  %v1096 = vsel %vm544, %v1091, %v1093
  %v1097 = vsel %vm544, %v1093, %v1095
  %v1101 = vsel %vm704, %v39, 0
  %1103 = vmatpush.msra.mxu0 0.0
  %1104 = vmatpush.msra.mxu0 0.0
  %1105 = vmatpush.msra.mxu0 0.0
  %1106 = vmatpush.msra.mxu0 0.0
  %1107 = vmatpush.msra.mxu0 0.0
  %1108 = vmatpush.msra.mxu0 0.0
  %1109 = vmatpush.msra.mxu0 0.0
  %1110 = vmatpush.msra.mxu0 0.0
  %1111 = vmatpush.msra.mxu0 0.0
  %1112 = vmatpush.msra.mxu0 0.0
  %1113 = vmatpush.msra.mxu0 0.0
  %1114 = vmatpush.msra.mxu0 0.0
  %1115 = vmatpush.msra.mxu0 0.0
  %1116 = vmatpush.msra.mxu0 0.0
  %1117 = vmatpush.msra.mxu0 0.0
  %1118 = vmatpush.msra.mxu0 %v1096
  %1119 = vmatmul.f32.gmra.mxu0 %v1101
  %v1120 = vpop.f32.mrf.mxu0
  %v1121 = vadd.f32 0.0, %v1120
  %1122 = vdwg.mxu0
  %1123 = vmatpush.msra.mxu0 0.0
  %1124 = vmatpush.msra.mxu0 0.0
  %1125 = vmatpush.msra.mxu0 0.0
  %1126 = vmatpush.msra.mxu0 0.0
  %1127 = vmatpush.msra.mxu0 0.0
  %1128 = vmatpush.msra.mxu0 0.0
  %1129 = vmatpush.msra.mxu0 0.0
  %1130 = vmatpush.msra.mxu0 0.0
  %1131 = vmatpush.msra.mxu0 0.0
  %1132 = vmatpush.msra.mxu0 0.0
  %1133 = vmatpush.msra.mxu0 0.0
  %1134 = vmatpush.msra.mxu0 0.0
  %1135 = vmatpush.msra.mxu0 0.0
  %1136 = vmatpush.msra.mxu0 0.0
  %1137 = vmatpush.msra.mxu0 0.0
  %1138 = vmatpush.msra.mxu0 %v1097
  %1139 = vmatmul.f32.gmra.mxu0 %v1101
  %v1140 = vpop.f32.mrf.mxu0
  %v1141 = vadd.f32 0.0, %v1140
  %1142 = vdwg.mxu0
  %v1143 = vadd.f32 %v1088, %v1121
  %v1144 = vadd.f32 %v1089, %v1141
  %v1145 = vmul.f32 %v688, %v597
  %v1146 = vmul.f32 %v684, %v601
  %v1147 = vmul.f32 %v689, %v599
  %1151 = vrot.lane.b32.xlu0 %v1145, 94
  %v1152 = vpop.permute.xlu0 %1151
  %1153 = vrot.lane.b32.xlu0 %v1146, 94
  %v1154 = vpop.permute.xlu0 %1153
  %1155 = vrot.lane.b32.xlu0 %v1147, 94
  %v1156 = vpop.permute.xlu0 %1155
  %v1157 = vsel %vm617, %v1152, %v1154
  %v1158 = vsel %vm617, %v1154, %v1156
  %v1162 = vsel %vm704, %v40, 0
  %1164 = vmatpush.msra.mxu0 0.0
  %1165 = vmatpush.msra.mxu0 0.0
  %1166 = vmatpush.msra.mxu0 0.0
  %1167 = vmatpush.msra.mxu0 0.0
  %1168 = vmatpush.msra.mxu0 0.0
  %1169 = vmatpush.msra.mxu0 0.0
  %1170 = vmatpush.msra.mxu0 0.0
  %1171 = vmatpush.msra.mxu0 0.0
  %1172 = vmatpush.msra.mxu0 0.0
  %1173 = vmatpush.msra.mxu0 0.0
  %1174 = vmatpush.msra.mxu0 0.0
  %1175 = vmatpush.msra.mxu0 0.0
  %1176 = vmatpush.msra.mxu0 0.0
  %1177 = vmatpush.msra.mxu0 0.0
  %1178 = vmatpush.msra.mxu0 0.0
  %1179 = vmatpush.msra.mxu0 %v1157
  %1180 = vmatmul.f32.gmra.mxu0 %v1162
  %v1181 = vpop.f32.mrf.mxu0
  %v1182 = vadd.f32 0.0, %v1181
  %1183 = vdwg.mxu0
  %1184 = vmatpush.msra.mxu0 0.0
  %1185 = vmatpush.msra.mxu0 0.0
  %1186 = vmatpush.msra.mxu0 0.0
  %1187 = vmatpush.msra.mxu0 0.0
  %1188 = vmatpush.msra.mxu0 0.0
  %1189 = vmatpush.msra.mxu0 0.0
  %1190 = vmatpush.msra.mxu0 0.0
  %1191 = vmatpush.msra.mxu0 0.0
  %1192 = vmatpush.msra.mxu0 0.0
  %1193 = vmatpush.msra.mxu0 0.0
  %1194 = vmatpush.msra.mxu0 0.0
  %1195 = vmatpush.msra.mxu0 0.0
  %1196 = vmatpush.msra.mxu0 0.0
  %1197 = vmatpush.msra.mxu0 0.0
  %1198 = vmatpush.msra.mxu0 0.0
  %1199 = vmatpush.msra.mxu0 %v1158
  %1200 = vmatmul.f32.gmra.mxu0 %v1162
  %v1201 = vpop.f32.mrf.mxu0
  %v1202 = vadd.f32 0.0, %v1201
  %1203 = vdwg.mxu0
  %v1204 = vadd.f32 %v1143, %v1182
  %v1205 = vadd.f32 %v1144, %v1202
  %1207 = vset.pattern.permute.xlu0 0
  %1208 = vperm.xlu0 %1207, %v42
  %v1209 = vpop.permute.xlu0 %1208
  %v1211 = vadd.f32 %v1204, %v1209
  %v1212 = vadd.f32 %v1205, %v1209
  %v1213 = vmax.f32 %v1211, 0.0
  %v1214 = vmax.f32 %v1212, 0.0
  %1215 = vst [vmem:[%s6] sm:$0xff] %v1213
  %1216 = vst [vmem:[%s6 + $0x8] sm:$0xff] %v1214
  %s1217 = scalar_lea.vmem %s0, 8
  %v1218 = vld [vmem:[%s1217] sm:$0xff]
  %1220 = vst [vmem:[#allocation1] ss:$2 sm:$0xff] %v1218
  %v1221 = vld.sshfl [vmem:[#allocation1] sm:$0xff pattern:$0x75316420]
  %v1222 = vld.sshfl [vmem:[#allocation1 + $0x8] sm:$0xff pattern:$0x75316420]
  %1223 = vrot.lane.b32.xlu0 %v1221, 17
  %v1224 = vpop.permute.xlu0 %1223
  %1225 = vrot.lane.b32.xlu0 %v1222, 17
  %v1226 = vpop.permute.xlu0 %1225
  %v1227 = vsel %vm53, %v1224, %v1226
  %v1231 = vsel %vm53, 0.0, %v1224
  %v1232 = vsel %vm53, %v1226, 0.0
  %v1233 = vmul.f32 %v1231, %v65
  %v1234 = vmul.f32 %v1227, %v66
  %1237 = vrot.lane.b32.xlu0 %v1231, 127
  %v1238 = vpop.permute.xlu0 %1237
  %1239 = vrot.lane.b32.xlu0 %v1227, 127
  %v1240 = vpop.permute.xlu0 %1239
  %1241 = vrot.lane.b32.xlu0 %v1232, 127
  %v1242 = vpop.permute.xlu0 %1241
  %v1243 = vsel %vm77, %v1238, %v1240
  %v1244 = vsel %vm77, %v1240, %v1242
  %v1245 = vsel %vm84, %v1243, 0
  %v1247 = vsel %vm84, %v1244, 0
  %1249 = vmatpush.msra.mxu0 0.0
  %1250 = vmatpush.msra.mxu0 0.0
  %1251 = vmatpush.msra.mxu0 0.0
  %1252 = vmatpush.msra.mxu0 0.0
  %1253 = vmatpush.msra.mxu0 0.0
  %1254 = vmatpush.msra.mxu0 0.0
  %1255 = vmatpush.msra.mxu0 0.0
  %1256 = vmatpush.msra.mxu0 0.0
  %1257 = vmatpush.msra.mxu0 0.0
  %1258 = vmatpush.msra.mxu0 0.0
  %1259 = vmatpush.msra.mxu0 0.0
  %1260 = vmatpush.msra.mxu0 0.0
  %1261 = vmatpush.msra.mxu0 0.0
  %1262 = vmatpush.msra.mxu0 0.0
  %1263 = vmatpush.msra.mxu0 0.0
  %1264 = vmatpush.msra.mxu0 %v1245
  %1265 = vmatmul.f32.gmra.mxu0 %v82
  %v1266 = vpop.f32.mrf.mxu0
  %v1267 = vadd.f32 0.0, %v1266
  %1268 = vdwg.mxu0
  %1269 = vmatpush.msra.mxu0 0.0
  %1270 = vmatpush.msra.mxu0 0.0
  %1271 = vmatpush.msra.mxu0 0.0
  %1272 = vmatpush.msra.mxu0 0.0
  %1273 = vmatpush.msra.mxu0 0.0
  %1274 = vmatpush.msra.mxu0 0.0
  %1275 = vmatpush.msra.mxu0 0.0
  %1276 = vmatpush.msra.mxu0 0.0
  %1277 = vmatpush.msra.mxu0 0.0
  %1278 = vmatpush.msra.mxu0 0.0
  %1279 = vmatpush.msra.mxu0 0.0
  %1280 = vmatpush.msra.mxu0 0.0
  %1281 = vmatpush.msra.mxu0 0.0
  %1282 = vmatpush.msra.mxu0 0.0
  %1283 = vmatpush.msra.mxu0 0.0
  %1284 = vmatpush.msra.mxu0 %v1247
  %1285 = vmatmul.f32.gmra.mxu0 %v82
  %v1286 = vpop.f32.mrf.mxu0
  %v1287 = vadd.f32 0.0, %v1286
  %1288 = vdwg.mxu0
  %v1290 = vsel %vm84, %v1233, 0
  %v1293 = vsel %vm84, %v1234, 0
  %1295 = vmatpush.msra.mxu0 0.0
  %1296 = vmatpush.msra.mxu0 0.0
  %1297 = vmatpush.msra.mxu0 0.0
  %1298 = vmatpush.msra.mxu0 0.0
  %1299 = vmatpush.msra.mxu0 0.0
  %1300 = vmatpush.msra.mxu0 0.0
  %1301 = vmatpush.msra.mxu0 0.0
  %1302 = vmatpush.msra.mxu0 0.0
  %1303 = vmatpush.msra.mxu0 0.0
  %1304 = vmatpush.msra.mxu0 0.0
  %1305 = vmatpush.msra.mxu0 0.0
  %1306 = vmatpush.msra.mxu0 0.0
  %1307 = vmatpush.msra.mxu0 0.0
  %1308 = vmatpush.msra.mxu0 0.0
  %1309 = vmatpush.msra.mxu0 0.0
  %1310 = vmatpush.msra.mxu0 %v1290
  %1311 = vmatmul.f32.gmra.mxu0 %v130
  %v1312 = vpop.f32.mrf.mxu0
  %v1313 = vadd.f32 %v1267, %v1312
  %1314 = vdwg.mxu0
  %1315 = vmatpush.msra.mxu0 0.0
  %1316 = vmatpush.msra.mxu0 0.0
  %1317 = vmatpush.msra.mxu0 0.0
  %1318 = vmatpush.msra.mxu0 0.0
  %1319 = vmatpush.msra.mxu0 0.0
  %1320 = vmatpush.msra.mxu0 0.0
  %1321 = vmatpush.msra.mxu0 0.0
  %1322 = vmatpush.msra.mxu0 0.0
  %1323 = vmatpush.msra.mxu0 0.0
  %1324 = vmatpush.msra.mxu0 0.0
  %1325 = vmatpush.msra.mxu0 0.0
  %1326 = vmatpush.msra.mxu0 0.0
  %1327 = vmatpush.msra.mxu0 0.0
  %1328 = vmatpush.msra.mxu0 0.0
  %1329 = vmatpush.msra.mxu0 0.0
  %1330 = vmatpush.msra.mxu0 %v1293
  %1331 = vmatmul.f32.gmra.mxu0 %v130
  %v1332 = vpop.f32.mrf.mxu0
  %v1333 = vadd.f32 %v1287, %v1332
  %1334 = vdwg.mxu0
  %v1335 = vmul.f32 %v1231, %v187
  %v1336 = vmul.f32 %v1227, %v191
  %v1337 = vmul.f32 %v1232, %v189
  %1341 = vrot.lane.b32.xlu0 %v1335, 126
  %v1342 = vpop.permute.xlu0 %1341
  %1343 = vrot.lane.b32.xlu0 %v1336, 126
  %v1344 = vpop.permute.xlu0 %1343
  %1345 = vrot.lane.b32.xlu0 %v1337, 126
  %v1346 = vpop.permute.xlu0 %1345
  %v1347 = vsel %vm207, %v1342, %v1344
  %v1348 = vsel %vm207, %v1344, %v1346
  %v1349 = vsel %vm84, %v1347, 0
  %v1351 = vsel %vm84, %v1348, 0
  %1353 = vmatpush.msra.mxu0 0.0
  %1354 = vmatpush.msra.mxu0 0.0
  %1355 = vmatpush.msra.mxu0 0.0
  %1356 = vmatpush.msra.mxu0 0.0
  %1357 = vmatpush.msra.mxu0 0.0
  %1358 = vmatpush.msra.mxu0 0.0
  %1359 = vmatpush.msra.mxu0 0.0
  %1360 = vmatpush.msra.mxu0 0.0
  %1361 = vmatpush.msra.mxu0 0.0
  %1362 = vmatpush.msra.mxu0 0.0
  %1363 = vmatpush.msra.mxu0 0.0
  %1364 = vmatpush.msra.mxu0 0.0
  %1365 = vmatpush.msra.mxu0 0.0
  %1366 = vmatpush.msra.mxu0 0.0
  %1367 = vmatpush.msra.mxu0 0.0
  %1368 = vmatpush.msra.mxu0 %v1349
  %1369 = vmatmul.f32.gmra.mxu0 %v211
  %v1370 = vpop.f32.mrf.mxu0
  %v1371 = vadd.f32 0.0, %v1370
  %1372 = vdwg.mxu0
  %1373 = vmatpush.msra.mxu0 0.0
  %1374 = vmatpush.msra.mxu0 0.0
  %1375 = vmatpush.msra.mxu0 0.0
  %1376 = vmatpush.msra.mxu0 0.0
  %1377 = vmatpush.msra.mxu0 0.0
  %1378 = vmatpush.msra.mxu0 0.0
  %1379 = vmatpush.msra.mxu0 0.0
  %1380 = vmatpush.msra.mxu0 0.0
  %1381 = vmatpush.msra.mxu0 0.0
  %1382 = vmatpush.msra.mxu0 0.0
  %1383 = vmatpush.msra.mxu0 0.0
  %1384 = vmatpush.msra.mxu0 0.0
  %1385 = vmatpush.msra.mxu0 0.0
  %1386 = vmatpush.msra.mxu0 0.0
  %1387 = vmatpush.msra.mxu0 0.0
  %1388 = vmatpush.msra.mxu0 %v1351
  %1389 = vmatmul.f32.gmra.mxu0 %v211
  %v1390 = vpop.f32.mrf.mxu0
  %v1391 = vadd.f32 0.0, %v1390
  %1392 = vdwg.mxu0
  %v1393 = vadd.f32 %v1313, %v1371
  %v1394 = vadd.f32 %v1333, %v1391
  %v1395 = vmul.f32 %v1231, %v262
  %v1396 = vmul.f32 %v1227, %v266
  %v1397 = vmul.f32 %v1232, %v264
  %1401 = vrot.lane.b32.xlu0 %v1395, 112
  %v1402 = vpop.permute.xlu0 %1401
  %1403 = vrot.lane.b32.xlu0 %v1396, 112
  %v1404 = vpop.permute.xlu0 %1403
  %1405 = vrot.lane.b32.xlu0 %v1397, 112
  %v1406 = vpop.permute.xlu0 %1405
  %v1407 = vsel %vm282, %v1402, %v1404
  %v1408 = vsel %vm282, %v1404, %v1406
  %v1409 = vsel %vm84, %v1407, 0
  %v1411 = vsel %vm84, %v1408, 0
  %1413 = vmatpush.msra.mxu0 0.0
  %1414 = vmatpush.msra.mxu0 0.0
  %1415 = vmatpush.msra.mxu0 0.0
  %1416 = vmatpush.msra.mxu0 0.0
  %1417 = vmatpush.msra.mxu0 0.0
  %1418 = vmatpush.msra.mxu0 0.0
  %1419 = vmatpush.msra.mxu0 0.0
  %1420 = vmatpush.msra.mxu0 0.0
  %1421 = vmatpush.msra.mxu0 0.0
  %1422 = vmatpush.msra.mxu0 0.0
  %1423 = vmatpush.msra.mxu0 0.0
  %1424 = vmatpush.msra.mxu0 0.0
  %1425 = vmatpush.msra.mxu0 0.0
  %1426 = vmatpush.msra.mxu0 0.0
  %1427 = vmatpush.msra.mxu0 0.0
  %1428 = vmatpush.msra.mxu0 %v1409
  %1429 = vmatmul.f32.gmra.mxu0 %v286
  %v1430 = vpop.f32.mrf.mxu0
  %v1431 = vadd.f32 0.0, %v1430
  %1432 = vdwg.mxu0
  %1433 = vmatpush.msra.mxu0 0.0
  %1434 = vmatpush.msra.mxu0 0.0
  %1435 = vmatpush.msra.mxu0 0.0
  %1436 = vmatpush.msra.mxu0 0.0
  %1437 = vmatpush.msra.mxu0 0.0
  %1438 = vmatpush.msra.mxu0 0.0
  %1439 = vmatpush.msra.mxu0 0.0
  %1440 = vmatpush.msra.mxu0 0.0
  %1441 = vmatpush.msra.mxu0 0.0
  %1442 = vmatpush.msra.mxu0 0.0
  %1443 = vmatpush.msra.mxu0 0.0
  %1444 = vmatpush.msra.mxu0 0.0
  %1445 = vmatpush.msra.mxu0 0.0
  %1446 = vmatpush.msra.mxu0 0.0
  %1447 = vmatpush.msra.mxu0 0.0
  %1448 = vmatpush.msra.mxu0 %v1411
  %1449 = vmatmul.f32.gmra.mxu0 %v286
  %v1450 = vpop.f32.mrf.mxu0
  %v1451 = vadd.f32 0.0, %v1450
  %1452 = vdwg.mxu0
  %v1453 = vadd.f32 %v1393, %v1431
  %v1454 = vadd.f32 %v1394, %v1451
  %1455 = vrot.lane.b32.xlu0 %v1231, 111
  %v1456 = vpop.permute.xlu0 %1455
  %1457 = vrot.lane.b32.xlu0 %v1227, 111
  %v1458 = vpop.permute.xlu0 %1457
  %1459 = vrot.lane.b32.xlu0 %v1232, 111
  %v1460 = vpop.permute.xlu0 %1459
  %v1461 = vsel %vm340, %v1456, %v1458
  %v1462 = vsel %vm340, %v1458, %v1460
  %v1463 = vsel %vm84, %v1461, 0
  %v1465 = vsel %vm84, %v1462, 0
  %1467 = vmatpush.msra.mxu0 0.0
  %1468 = vmatpush.msra.mxu0 0.0
  %1469 = vmatpush.msra.mxu0 0.0
  %1470 = vmatpush.msra.mxu0 0.0
  %1471 = vmatpush.msra.mxu0 0.0
  %1472 = vmatpush.msra.mxu0 0.0
  %1473 = vmatpush.msra.mxu0 0.0
  %1474 = vmatpush.msra.mxu0 0.0
  %1475 = vmatpush.msra.mxu0 0.0
  %1476 = vmatpush.msra.mxu0 0.0
  %1477 = vmatpush.msra.mxu0 0.0
  %1478 = vmatpush.msra.mxu0 0.0
  %1479 = vmatpush.msra.mxu0 0.0
  %1480 = vmatpush.msra.mxu0 0.0
  %1481 = vmatpush.msra.mxu0 0.0
  %1482 = vmatpush.msra.mxu0 %v1463
  %1483 = vmatmul.f32.gmra.mxu0 %v344
  %v1484 = vpop.f32.mrf.mxu0
  %v1485 = vadd.f32 0.0, %v1484
  %1486 = vdwg.mxu0
  %1487 = vmatpush.msra.mxu0 0.0
  %1488 = vmatpush.msra.mxu0 0.0
  %1489 = vmatpush.msra.mxu0 0.0
  %1490 = vmatpush.msra.mxu0 0.0
  %1491 = vmatpush.msra.mxu0 0.0
  %1492 = vmatpush.msra.mxu0 0.0
  %1493 = vmatpush.msra.mxu0 0.0
  %1494 = vmatpush.msra.mxu0 0.0
  %1495 = vmatpush.msra.mxu0 0.0
  %1496 = vmatpush.msra.mxu0 0.0
  %1497 = vmatpush.msra.mxu0 0.0
  %1498 = vmatpush.msra.mxu0 0.0
  %1499 = vmatpush.msra.mxu0 0.0
  %1500 = vmatpush.msra.mxu0 0.0
  %1501 = vmatpush.msra.mxu0 0.0
  %1502 = vmatpush.msra.mxu0 %v1465
  %1503 = vmatmul.f32.gmra.mxu0 %v344
  %v1504 = vpop.f32.mrf.mxu0
  %v1505 = vadd.f32 0.0, %v1504
  %1506 = vdwg.mxu0
  %v1507 = vadd.f32 %v1453, %v1485
  %v1508 = vadd.f32 %v1454, %v1505
  %v1509 = vmul.f32 %v1231, %v393
  %v1510 = vmul.f32 %v1227, %v397
  %v1511 = vmul.f32 %v1232, %v395
  %1515 = vrot.lane.b32.xlu0 %v1509, 110
  %v1516 = vpop.permute.xlu0 %1515
  %1517 = vrot.lane.b32.xlu0 %v1510, 110
  %v1518 = vpop.permute.xlu0 %1517
  %1519 = vrot.lane.b32.xlu0 %v1511, 110
  %v1520 = vpop.permute.xlu0 %1519
  %v1521 = vsel %vm413, %v1516, %v1518
  %v1522 = vsel %vm413, %v1518, %v1520
  %v1523 = vsel %vm84, %v1521, 0
  %v1525 = vsel %vm84, %v1522, 0
  %1527 = vmatpush.msra.mxu0 0.0
  %1528 = vmatpush.msra.mxu0 0.0
  %1529 = vmatpush.msra.mxu0 0.0
  %1530 = vmatpush.msra.mxu0 0.0
  %1531 = vmatpush.msra.mxu0 0.0
  %1532 = vmatpush.msra.mxu0 0.0
  %1533 = vmatpush.msra.mxu0 0.0
  %1534 = vmatpush.msra.mxu0 0.0
  %1535 = vmatpush.msra.mxu0 0.0
  %1536 = vmatpush.msra.mxu0 0.0
  %1537 = vmatpush.msra.mxu0 0.0
  %1538 = vmatpush.msra.mxu0 0.0
  %1539 = vmatpush.msra.mxu0 0.0
  %1540 = vmatpush.msra.mxu0 0.0
  %1541 = vmatpush.msra.mxu0 0.0
  %1542 = vmatpush.msra.mxu0 %v1523
  %1543 = vmatmul.f32.gmra.mxu0 %v417
  %v1544 = vpop.f32.mrf.mxu0
  %v1545 = vadd.f32 0.0, %v1544
  %1546 = vdwg.mxu0
  %1547 = vmatpush.msra.mxu0 0.0
  %1548 = vmatpush.msra.mxu0 0.0
  %1549 = vmatpush.msra.mxu0 0.0
  %1550 = vmatpush.msra.mxu0 0.0
  %1551 = vmatpush.msra.mxu0 0.0
  %1552 = vmatpush.msra.mxu0 0.0
  %1553 = vmatpush.msra.mxu0 0.0
  %1554 = vmatpush.msra.mxu0 0.0
  %1555 = vmatpush.msra.mxu0 0.0
  %1556 = vmatpush.msra.mxu0 0.0
  %1557 = vmatpush.msra.mxu0 0.0
  %1558 = vmatpush.msra.mxu0 0.0
  %1559 = vmatpush.msra.mxu0 0.0
  %1560 = vmatpush.msra.mxu0 0.0
  %1561 = vmatpush.msra.mxu0 0.0
  %1562 = vmatpush.msra.mxu0 %v1525
  %1563 = vmatmul.f32.gmra.mxu0 %v417
  %v1564 = vpop.f32.mrf.mxu0
  %v1565 = vadd.f32 0.0, %v1564
  %1566 = vdwg.mxu0
  %v1567 = vadd.f32 %v1507, %v1545
  %v1568 = vadd.f32 %v1508, %v1565
  %v1569 = vmul.f32 %v1231, %v466
  %v1570 = vmul.f32 %v1227, %v470
  %v1571 = vmul.f32 %v1232, %v468
  %1575 = vrot.lane.b32.xlu0 %v1569, 96
  %v1576 = vpop.permute.xlu0 %1575
  %1577 = vrot.lane.b32.xlu0 %v1570, 96
  %v1578 = vpop.permute.xlu0 %1577
  %1579 = vrot.lane.b32.xlu0 %v1571, 96
  %v1580 = vpop.permute.xlu0 %1579
  %v1581 = vsel %vm486, %v1576, %v1578
  %v1582 = vsel %vm486, %v1578, %v1580
  %v1583 = vsel %vm84, %v1581, 0
  %v1585 = vsel %vm84, %v1582, 0
  %1587 = vmatpush.msra.mxu0 0.0
  %1588 = vmatpush.msra.mxu0 0.0
  %1589 = vmatpush.msra.mxu0 0.0
  %1590 = vmatpush.msra.mxu0 0.0
  %1591 = vmatpush.msra.mxu0 0.0
  %1592 = vmatpush.msra.mxu0 0.0
  %1593 = vmatpush.msra.mxu0 0.0
  %1594 = vmatpush.msra.mxu0 0.0
  %1595 = vmatpush.msra.mxu0 0.0
  %1596 = vmatpush.msra.mxu0 0.0
  %1597 = vmatpush.msra.mxu0 0.0
  %1598 = vmatpush.msra.mxu0 0.0
  %1599 = vmatpush.msra.mxu0 0.0
  %1600 = vmatpush.msra.mxu0 0.0
  %1601 = vmatpush.msra.mxu0 0.0
  %1602 = vmatpush.msra.mxu0 %v1583
  %1603 = vmatmul.f32.gmra.mxu0 %v490
  %v1604 = vpop.f32.mrf.mxu0
  %v1605 = vadd.f32 0.0, %v1604
  %1606 = vdwg.mxu0
  %1607 = vmatpush.msra.mxu0 0.0
  %1608 = vmatpush.msra.mxu0 0.0
  %1609 = vmatpush.msra.mxu0 0.0
  %1610 = vmatpush.msra.mxu0 0.0
  %1611 = vmatpush.msra.mxu0 0.0
  %1612 = vmatpush.msra.mxu0 0.0
  %1613 = vmatpush.msra.mxu0 0.0
  %1614 = vmatpush.msra.mxu0 0.0
  %1615 = vmatpush.msra.mxu0 0.0
  %1616 = vmatpush.msra.mxu0 0.0
  %1617 = vmatpush.msra.mxu0 0.0
  %1618 = vmatpush.msra.mxu0 0.0
  %1619 = vmatpush.msra.mxu0 0.0
  %1620 = vmatpush.msra.mxu0 0.0
  %1621 = vmatpush.msra.mxu0 0.0
  %1622 = vmatpush.msra.mxu0 %v1585
  %1623 = vmatmul.f32.gmra.mxu0 %v490
  %v1624 = vpop.f32.mrf.mxu0
  %v1625 = vadd.f32 0.0, %v1624
  %1626 = vdwg.mxu0
  %v1627 = vadd.f32 %v1567, %v1605
  %v1628 = vadd.f32 %v1568, %v1625
  %1629 = vrot.lane.b32.xlu0 %v1231, 95
  %v1630 = vpop.permute.xlu0 %1629
  %1631 = vrot.lane.b32.xlu0 %v1227, 95
  %v1632 = vpop.permute.xlu0 %1631
  %1633 = vrot.lane.b32.xlu0 %v1232, 95
  %v1634 = vpop.permute.xlu0 %1633
  %v1635 = vsel %vm544, %v1630, %v1632
  %v1636 = vsel %vm544, %v1632, %v1634
  %v1637 = vsel %vm84, %v1635, 0
  %v1639 = vsel %vm84, %v1636, 0
  %1641 = vmatpush.msra.mxu0 0.0
  %1642 = vmatpush.msra.mxu0 0.0
  %1643 = vmatpush.msra.mxu0 0.0
  %1644 = vmatpush.msra.mxu0 0.0
  %1645 = vmatpush.msra.mxu0 0.0
  %1646 = vmatpush.msra.mxu0 0.0
  %1647 = vmatpush.msra.mxu0 0.0
  %1648 = vmatpush.msra.mxu0 0.0
  %1649 = vmatpush.msra.mxu0 0.0
  %1650 = vmatpush.msra.mxu0 0.0
  %1651 = vmatpush.msra.mxu0 0.0
  %1652 = vmatpush.msra.mxu0 0.0
  %1653 = vmatpush.msra.mxu0 0.0
  %1654 = vmatpush.msra.mxu0 0.0
  %1655 = vmatpush.msra.mxu0 0.0
  %1656 = vmatpush.msra.mxu0 %v1637
  %1657 = vmatmul.f32.gmra.mxu0 %v548
  %v1658 = vpop.f32.mrf.mxu0
  %v1659 = vadd.f32 0.0, %v1658
  %1660 = vdwg.mxu0
  %1661 = vmatpush.msra.mxu0 0.0
  %1662 = vmatpush.msra.mxu0 0.0
  %1663 = vmatpush.msra.mxu0 0.0
  %1664 = vmatpush.msra.mxu0 0.0
  %1665 = vmatpush.msra.mxu0 0.0
  %1666 = vmatpush.msra.mxu0 0.0
  %1667 = vmatpush.msra.mxu0 0.0
  %1668 = vmatpush.msra.mxu0 0.0
  %1669 = vmatpush.msra.mxu0 0.0
  %1670 = vmatpush.msra.mxu0 0.0
  %1671 = vmatpush.msra.mxu0 0.0
  %1672 = vmatpush.msra.mxu0 0.0
  %1673 = vmatpush.msra.mxu0 0.0
  %1674 = vmatpush.msra.mxu0 0.0
  %1675 = vmatpush.msra.mxu0 0.0
  %1676 = vmatpush.msra.mxu0 %v1639
  %1677 = vmatmul.f32.gmra.mxu0 %v548
  %v1678 = vpop.f32.mrf.mxu0
  %v1679 = vadd.f32 0.0, %v1678
  %1680 = vdwg.mxu0
  %v1681 = vadd.f32 %v1627, %v1659
  %v1682 = vadd.f32 %v1628, %v1679
  %v1683 = vmul.f32 %v1231, %v597
  %v1684 = vmul.f32 %v1227, %v601
  %v1685 = vmul.f32 %v1232, %v599
  %1689 = vrot.lane.b32.xlu0 %v1683, 94
  %v1690 = vpop.permute.xlu0 %1689
  %1691 = vrot.lane.b32.xlu0 %v1684, 94
  %v1692 = vpop.permute.xlu0 %1691
  %1693 = vrot.lane.b32.xlu0 %v1685, 94
  %v1694 = vpop.permute.xlu0 %1693
  %v1695 = vsel %vm617, %v1690, %v1692
  %v1696 = vsel %vm617, %v1692, %v1694
  %v1697 = vsel %vm84, %v1695, 0
  %v1699 = vsel %vm84, %v1696, 0
  %1701 = vmatpush.msra.mxu0 0.0
  %1702 = vmatpush.msra.mxu0 0.0
  %1703 = vmatpush.msra.mxu0 0.0
  %1704 = vmatpush.msra.mxu0 0.0
  %1705 = vmatpush.msra.mxu0 0.0
  %1706 = vmatpush.msra.mxu0 0.0
  %1707 = vmatpush.msra.mxu0 0.0
  %1708 = vmatpush.msra.mxu0 0.0
  %1709 = vmatpush.msra.mxu0 0.0
  %1710 = vmatpush.msra.mxu0 0.0
  %1711 = vmatpush.msra.mxu0 0.0
  %1712 = vmatpush.msra.mxu0 0.0
  %1713 = vmatpush.msra.mxu0 0.0
  %1714 = vmatpush.msra.mxu0 0.0
  %1715 = vmatpush.msra.mxu0 0.0
  %1716 = vmatpush.msra.mxu0 %v1697
  %1717 = vmatmul.f32.gmra.mxu0 %v621
  %v1718 = vpop.f32.mrf.mxu0
  %v1719 = vadd.f32 0.0, %v1718
  %1720 = vdwg.mxu0
  %1721 = vmatpush.msra.mxu0 0.0
  %1722 = vmatpush.msra.mxu0 0.0
  %1723 = vmatpush.msra.mxu0 0.0
  %1724 = vmatpush.msra.mxu0 0.0
  %1725 = vmatpush.msra.mxu0 0.0
  %1726 = vmatpush.msra.mxu0 0.0
  %1727 = vmatpush.msra.mxu0 0.0
  %1728 = vmatpush.msra.mxu0 0.0
  %1729 = vmatpush.msra.mxu0 0.0
  %1730 = vmatpush.msra.mxu0 0.0
  %1731 = vmatpush.msra.mxu0 0.0
  %1732 = vmatpush.msra.mxu0 0.0
  %1733 = vmatpush.msra.mxu0 0.0
  %1734 = vmatpush.msra.mxu0 0.0
  %1735 = vmatpush.msra.mxu0 0.0
  %1736 = vmatpush.msra.mxu0 %v1699
  %1737 = vmatmul.f32.gmra.mxu0 %v621
  %v1738 = vpop.f32.mrf.mxu0
  %v1739 = vadd.f32 0.0, %v1738
  %1740 = vdwg.mxu0
  %v1741 = vadd.f32 %v1681, %v1719
  %v1742 = vadd.f32 %v1682, %v1739
  %v1743 = vadd.f32 %v1741, %v672
  %v1744 = vadd.f32 %v1742, %v672
  %v1745 = vmax.f32 %v1743, 0.0
  %v1746 = vmax.f32 %v1744, 0.0
  %1749 = vrot.lane.b32.xlu0 %v1745, 17
  %v1750 = vpop.permute.xlu0 %1749
  %1751 = vrot.lane.b32.xlu0 %v1746, 17
  %v1752 = vpop.permute.xlu0 %1751
  %v1753 = vsel %vm53, %v1750, %v1752
  %v1757 = vsel %vm53, 0.0, %v1750
  %v1758 = vsel %vm53, %v1752, 0.0
  %v1759 = vmul.f32 %v1757, %v65
  %v1760 = vmul.f32 %v1753, %v66
  %1763 = vrot.lane.b32.xlu0 %v1757, 127
  %v1764 = vpop.permute.xlu0 %1763
  %1765 = vrot.lane.b32.xlu0 %v1753, 127
  %v1766 = vpop.permute.xlu0 %1765
  %1767 = vrot.lane.b32.xlu0 %v1758, 127
  %v1768 = vpop.permute.xlu0 %1767
  %v1769 = vsel %vm77, %v1764, %v1766
  %v1770 = vsel %vm77, %v1766, %v1768
  %1773 = vmatpush.msra.mxu0 0.0
  %1774 = vmatpush.msra.mxu0 0.0
  %1775 = vmatpush.msra.mxu0 0.0
  %1776 = vmatpush.msra.mxu0 0.0
  %1777 = vmatpush.msra.mxu0 0.0
  %1778 = vmatpush.msra.mxu0 0.0
  %1779 = vmatpush.msra.mxu0 0.0
  %1780 = vmatpush.msra.mxu0 0.0
  %1781 = vmatpush.msra.mxu0 0.0
  %1782 = vmatpush.msra.mxu0 0.0
  %1783 = vmatpush.msra.mxu0 0.0
  %1784 = vmatpush.msra.mxu0 0.0
  %1785 = vmatpush.msra.mxu0 0.0
  %1786 = vmatpush.msra.mxu0 0.0
  %1787 = vmatpush.msra.mxu0 0.0
  %1788 = vmatpush.msra.mxu0 %v1769
  %1789 = vmatmul.f32.gmra.mxu0 %v706
  %v1790 = vpop.f32.mrf.mxu0
  %v1791 = vadd.f32 0.0, %v1790
  %1792 = vdwg.mxu0
  %1793 = vmatpush.msra.mxu0 0.0
  %1794 = vmatpush.msra.mxu0 0.0
  %1795 = vmatpush.msra.mxu0 0.0
  %1796 = vmatpush.msra.mxu0 0.0
  %1797 = vmatpush.msra.mxu0 0.0
  %1798 = vmatpush.msra.mxu0 0.0
  %1799 = vmatpush.msra.mxu0 0.0
  %1800 = vmatpush.msra.mxu0 0.0
  %1801 = vmatpush.msra.mxu0 0.0
  %1802 = vmatpush.msra.mxu0 0.0
  %1803 = vmatpush.msra.mxu0 0.0
  %1804 = vmatpush.msra.mxu0 0.0
  %1805 = vmatpush.msra.mxu0 0.0
  %1806 = vmatpush.msra.mxu0 0.0
  %1807 = vmatpush.msra.mxu0 0.0
  %1808 = vmatpush.msra.mxu0 %v1770
  %1809 = vmatmul.f32.gmra.mxu0 %v706
  %v1810 = vpop.f32.mrf.mxu0
  %v1811 = vadd.f32 0.0, %v1810
  %1812 = vdwg.mxu0
  %1813 = vmatpush.msra.mxu0 0.0
  %1814 = vmatpush.msra.mxu0 0.0
  %1815 = vmatpush.msra.mxu0 0.0
  %1816 = vmatpush.msra.mxu0 0.0
  %1817 = vmatpush.msra.mxu0 0.0
  %1818 = vmatpush.msra.mxu0 0.0
  %1819 = vmatpush.msra.mxu0 0.0
  %1820 = vmatpush.msra.mxu0 0.0
  %1821 = vmatpush.msra.mxu0 0.0
  %1822 = vmatpush.msra.mxu0 0.0
  %1823 = vmatpush.msra.mxu0 0.0
  %1824 = vmatpush.msra.mxu0 0.0
  %1825 = vmatpush.msra.mxu0 0.0
  %1826 = vmatpush.msra.mxu0 0.0
  %1827 = vmatpush.msra.mxu0 0.0
  %1828 = vmatpush.msra.mxu0 %v1759
  %1829 = vmatmul.f32.gmra.mxu0 %v749
  %v1830 = vpop.f32.mrf.mxu0
  %v1831 = vadd.f32 %v1791, %v1830
  %1832 = vdwg.mxu0
  %1833 = vmatpush.msra.mxu0 0.0
  %1834 = vmatpush.msra.mxu0 0.0
  %1835 = vmatpush.msra.mxu0 0.0
  %1836 = vmatpush.msra.mxu0 0.0
  %1837 = vmatpush.msra.mxu0 0.0
  %1838 = vmatpush.msra.mxu0 0.0
  %1839 = vmatpush.msra.mxu0 0.0
  %1840 = vmatpush.msra.mxu0 0.0
  %1841 = vmatpush.msra.mxu0 0.0
  %1842 = vmatpush.msra.mxu0 0.0
  %1843 = vmatpush.msra.mxu0 0.0
  %1844 = vmatpush.msra.mxu0 0.0
  %1845 = vmatpush.msra.mxu0 0.0
  %1846 = vmatpush.msra.mxu0 0.0
  %1847 = vmatpush.msra.mxu0 0.0
  %1848 = vmatpush.msra.mxu0 %v1760
  %1849 = vmatmul.f32.gmra.mxu0 %v749
  %v1850 = vpop.f32.mrf.mxu0
  %v1851 = vadd.f32 %v1811, %v1850
  %1852 = vdwg.mxu0
  %v1853 = vmul.f32 %v1757, %v187
  %v1854 = vmul.f32 %v1753, %v191
  %v1855 = vmul.f32 %v1758, %v189
  %1859 = vrot.lane.b32.xlu0 %v1853, 126
  %v1860 = vpop.permute.xlu0 %1859
  %1861 = vrot.lane.b32.xlu0 %v1854, 126
  %v1862 = vpop.permute.xlu0 %1861
  %1863 = vrot.lane.b32.xlu0 %v1855, 126
  %v1864 = vpop.permute.xlu0 %1863
  %v1865 = vsel %vm207, %v1860, %v1862
  %v1866 = vsel %vm207, %v1862, %v1864
  %1869 = vmatpush.msra.mxu0 0.0
  %1870 = vmatpush.msra.mxu0 0.0
  %1871 = vmatpush.msra.mxu0 0.0
  %1872 = vmatpush.msra.mxu0 0.0
  %1873 = vmatpush.msra.mxu0 0.0
  %1874 = vmatpush.msra.mxu0 0.0
  %1875 = vmatpush.msra.mxu0 0.0
  %1876 = vmatpush.msra.mxu0 0.0
  %1877 = vmatpush.msra.mxu0 0.0
  %1878 = vmatpush.msra.mxu0 0.0
  %1879 = vmatpush.msra.mxu0 0.0
  %1880 = vmatpush.msra.mxu0 0.0
  %1881 = vmatpush.msra.mxu0 0.0
  %1882 = vmatpush.msra.mxu0 0.0
  %1883 = vmatpush.msra.mxu0 0.0
  %1884 = vmatpush.msra.mxu0 %v1865
  %1885 = vmatmul.f32.gmra.mxu0 %v808
  %v1886 = vpop.f32.mrf.mxu0
  %v1887 = vadd.f32 0.0, %v1886
  %1888 = vdwg.mxu0
  %1889 = vmatpush.msra.mxu0 0.0
  %1890 = vmatpush.msra.mxu0 0.0
  %1891 = vmatpush.msra.mxu0 0.0
  %1892 = vmatpush.msra.mxu0 0.0
  %1893 = vmatpush.msra.mxu0 0.0
  %1894 = vmatpush.msra.mxu0 0.0
  %1895 = vmatpush.msra.mxu0 0.0
  %1896 = vmatpush.msra.mxu0 0.0
  %1897 = vmatpush.msra.mxu0 0.0
  %1898 = vmatpush.msra.mxu0 0.0
  %1899 = vmatpush.msra.mxu0 0.0
  %1900 = vmatpush.msra.mxu0 0.0
  %1901 = vmatpush.msra.mxu0 0.0
  %1902 = vmatpush.msra.mxu0 0.0
  %1903 = vmatpush.msra.mxu0 0.0
  %1904 = vmatpush.msra.mxu0 %v1866
  %1905 = vmatmul.f32.gmra.mxu0 %v808
  %v1906 = vpop.f32.mrf.mxu0
  %v1907 = vadd.f32 0.0, %v1906
  %1908 = vdwg.mxu0
  %v1909 = vadd.f32 %v1831, %v1887
  %v1910 = vadd.f32 %v1851, %v1907
  %v1911 = vmul.f32 %v1757, %v262
  %v1912 = vmul.f32 %v1753, %v266
  %v1913 = vmul.f32 %v1758, %v264
  %1917 = vrot.lane.b32.xlu0 %v1911, 112
  %v1918 = vpop.permute.xlu0 %1917
  %1919 = vrot.lane.b32.xlu0 %v1912, 112
  %v1920 = vpop.permute.xlu0 %1919
  %1921 = vrot.lane.b32.xlu0 %v1913, 112
  %v1922 = vpop.permute.xlu0 %1921
  %v1923 = vsel %vm282, %v1918, %v1920
  %v1924 = vsel %vm282, %v1920, %v1922
  %1927 = vmatpush.msra.mxu0 0.0
  %1928 = vmatpush.msra.mxu0 0.0
  %1929 = vmatpush.msra.mxu0 0.0
  %1930 = vmatpush.msra.mxu0 0.0
  %1931 = vmatpush.msra.mxu0 0.0
  %1932 = vmatpush.msra.mxu0 0.0
  %1933 = vmatpush.msra.mxu0 0.0
  %1934 = vmatpush.msra.mxu0 0.0
  %1935 = vmatpush.msra.mxu0 0.0
  %1936 = vmatpush.msra.mxu0 0.0
  %1937 = vmatpush.msra.mxu0 0.0
  %1938 = vmatpush.msra.mxu0 0.0
  %1939 = vmatpush.msra.mxu0 0.0
  %1940 = vmatpush.msra.mxu0 0.0
  %1941 = vmatpush.msra.mxu0 0.0
  %1942 = vmatpush.msra.mxu0 %v1923
  %1943 = vmatmul.f32.gmra.mxu0 %v869
  %v1944 = vpop.f32.mrf.mxu0
  %v1945 = vadd.f32 0.0, %v1944
  %1946 = vdwg.mxu0
  %1947 = vmatpush.msra.mxu0 0.0
  %1948 = vmatpush.msra.mxu0 0.0
  %1949 = vmatpush.msra.mxu0 0.0
  %1950 = vmatpush.msra.mxu0 0.0
  %1951 = vmatpush.msra.mxu0 0.0
  %1952 = vmatpush.msra.mxu0 0.0
  %1953 = vmatpush.msra.mxu0 0.0
  %1954 = vmatpush.msra.mxu0 0.0
  %1955 = vmatpush.msra.mxu0 0.0
  %1956 = vmatpush.msra.mxu0 0.0
  %1957 = vmatpush.msra.mxu0 0.0
  %1958 = vmatpush.msra.mxu0 0.0
  %1959 = vmatpush.msra.mxu0 0.0
  %1960 = vmatpush.msra.mxu0 0.0
  %1961 = vmatpush.msra.mxu0 0.0
  %1962 = vmatpush.msra.mxu0 %v1924
  %1963 = vmatmul.f32.gmra.mxu0 %v869
  %v1964 = vpop.f32.mrf.mxu0
  %v1965 = vadd.f32 0.0, %v1964
  %1966 = vdwg.mxu0
  %v1967 = vadd.f32 %v1909, %v1945
  %v1968 = vadd.f32 %v1910, %v1965
  %1969 = vrot.lane.b32.xlu0 %v1757, 111
  %v1970 = vpop.permute.xlu0 %1969
  %1971 = vrot.lane.b32.xlu0 %v1753, 111
  %v1972 = vpop.permute.xlu0 %1971
  %1973 = vrot.lane.b32.xlu0 %v1758, 111
  %v1974 = vpop.permute.xlu0 %1973
  %v1975 = vsel %vm340, %v1970, %v1972
  %v1976 = vsel %vm340, %v1972, %v1974
  %1979 = vmatpush.msra.mxu0 0.0
  %1980 = vmatpush.msra.mxu0 0.0
  %1981 = vmatpush.msra.mxu0 0.0
  %1982 = vmatpush.msra.mxu0 0.0
  %1983 = vmatpush.msra.mxu0 0.0
  %1984 = vmatpush.msra.mxu0 0.0
  %1985 = vmatpush.msra.mxu0 0.0
  %1986 = vmatpush.msra.mxu0 0.0
  %1987 = vmatpush.msra.mxu0 0.0
  %1988 = vmatpush.msra.mxu0 0.0
  %1989 = vmatpush.msra.mxu0 0.0
  %1990 = vmatpush.msra.mxu0 0.0
  %1991 = vmatpush.msra.mxu0 0.0
  %1992 = vmatpush.msra.mxu0 0.0
  %1993 = vmatpush.msra.mxu0 0.0
  %1994 = vmatpush.msra.mxu0 %v1975
  %1995 = vmatmul.f32.gmra.mxu0 %v924
  %v1996 = vpop.f32.mrf.mxu0
  %v1997 = vadd.f32 0.0, %v1996
  %1998 = vdwg.mxu0
  %1999 = vmatpush.msra.mxu0 0.0
  %2000 = vmatpush.msra.mxu0 0.0
  %2001 = vmatpush.msra.mxu0 0.0
  %2002 = vmatpush.msra.mxu0 0.0
  %2003 = vmatpush.msra.mxu0 0.0
  %2004 = vmatpush.msra.mxu0 0.0
  %2005 = vmatpush.msra.mxu0 0.0
  %2006 = vmatpush.msra.mxu0 0.0
  %2007 = vmatpush.msra.mxu0 0.0
  %2008 = vmatpush.msra.mxu0 0.0
  %2009 = vmatpush.msra.mxu0 0.0
  %2010 = vmatpush.msra.mxu0 0.0
  %2011 = vmatpush.msra.mxu0 0.0
  %2012 = vmatpush.msra.mxu0 0.0
  %2013 = vmatpush.msra.mxu0 0.0
  %2014 = vmatpush.msra.mxu0 %v1976
  %2015 = vmatmul.f32.gmra.mxu0 %v924
  %v2016 = vpop.f32.mrf.mxu0
  %v2017 = vadd.f32 0.0, %v2016
  %2018 = vdwg.mxu0
  %v2019 = vadd.f32 %v1967, %v1997
  %v2020 = vadd.f32 %v1968, %v2017
  %v2021 = vmul.f32 %v1757, %v393
  %v2022 = vmul.f32 %v1753, %v397
  %v2023 = vmul.f32 %v1758, %v395
  %2027 = vrot.lane.b32.xlu0 %v2021, 110
  %v2028 = vpop.permute.xlu0 %2027
  %2029 = vrot.lane.b32.xlu0 %v2022, 110
  %v2030 = vpop.permute.xlu0 %2029
  %2031 = vrot.lane.b32.xlu0 %v2023, 110
  %v2032 = vpop.permute.xlu0 %2031
  %v2033 = vsel %vm413, %v2028, %v2030
  %v2034 = vsel %vm413, %v2030, %v2032
  %2037 = vmatpush.msra.mxu0 0.0
  %2038 = vmatpush.msra.mxu0 0.0
  %2039 = vmatpush.msra.mxu0 0.0
  %2040 = vmatpush.msra.mxu0 0.0
  %2041 = vmatpush.msra.mxu0 0.0
  %2042 = vmatpush.msra.mxu0 0.0
  %2043 = vmatpush.msra.mxu0 0.0
  %2044 = vmatpush.msra.mxu0 0.0
  %2045 = vmatpush.msra.mxu0 0.0
  %2046 = vmatpush.msra.mxu0 0.0
  %2047 = vmatpush.msra.mxu0 0.0
  %2048 = vmatpush.msra.mxu0 0.0
  %2049 = vmatpush.msra.mxu0 0.0
  %2050 = vmatpush.msra.mxu0 0.0
  %2051 = vmatpush.msra.mxu0 0.0
  %2052 = vmatpush.msra.mxu0 %v2033
  %2053 = vmatmul.f32.gmra.mxu0 %v985
  %v2054 = vpop.f32.mrf.mxu0
  %v2055 = vadd.f32 0.0, %v2054
  %2056 = vdwg.mxu0
  %2057 = vmatpush.msra.mxu0 0.0
  %2058 = vmatpush.msra.mxu0 0.0
  %2059 = vmatpush.msra.mxu0 0.0
  %2060 = vmatpush.msra.mxu0 0.0
  %2061 = vmatpush.msra.mxu0 0.0
  %2062 = vmatpush.msra.mxu0 0.0
  %2063 = vmatpush.msra.mxu0 0.0
  %2064 = vmatpush.msra.mxu0 0.0
  %2065 = vmatpush.msra.mxu0 0.0
  %2066 = vmatpush.msra.mxu0 0.0
  %2067 = vmatpush.msra.mxu0 0.0
  %2068 = vmatpush.msra.mxu0 0.0
  %2069 = vmatpush.msra.mxu0 0.0
  %2070 = vmatpush.msra.mxu0 0.0
  %2071 = vmatpush.msra.mxu0 0.0
  %2072 = vmatpush.msra.mxu0 %v2034
  %2073 = vmatmul.f32.gmra.mxu0 %v985
  %v2074 = vpop.f32.mrf.mxu0
  %v2075 = vadd.f32 0.0, %v2074
  %2076 = vdwg.mxu0
  %v2077 = vadd.f32 %v2019, %v2055
  %v2078 = vadd.f32 %v2020, %v2075
  %v2079 = vmul.f32 %v1757, %v466
  %v2080 = vmul.f32 %v1753, %v470
  %v2081 = vmul.f32 %v1758, %v468
  %2085 = vrot.lane.b32.xlu0 %v2079, 96
  %v2086 = vpop.permute.xlu0 %2085
  %2087 = vrot.lane.b32.xlu0 %v2080, 96
  %v2088 = vpop.permute.xlu0 %2087
  %2089 = vrot.lane.b32.xlu0 %v2081, 96
  %v2090 = vpop.permute.xlu0 %2089
  %v2091 = vsel %vm486, %v2086, %v2088
  %v2092 = vsel %vm486, %v2088, %v2090
  %2095 = vmatpush.msra.mxu0 0.0
  %2096 = vmatpush.msra.mxu0 0.0
  %2097 = vmatpush.msra.mxu0 0.0
  %2098 = vmatpush.msra.mxu0 0.0
  %2099 = vmatpush.msra.mxu0 0.0
  %2100 = vmatpush.msra.mxu0 0.0
  %2101 = vmatpush.msra.mxu0 0.0
  %2102 = vmatpush.msra.mxu0 0.0
  %2103 = vmatpush.msra.mxu0 0.0
  %2104 = vmatpush.msra.mxu0 0.0
  %2105 = vmatpush.msra.mxu0 0.0
  %2106 = vmatpush.msra.mxu0 0.0
  %2107 = vmatpush.msra.mxu0 0.0
  %2108 = vmatpush.msra.mxu0 0.0
  %2109 = vmatpush.msra.mxu0 0.0
  %2110 = vmatpush.msra.mxu0 %v2091
  %2111 = vmatmul.f32.gmra.mxu0 %v1046
  %v2112 = vpop.f32.mrf.mxu0
  %v2113 = vadd.f32 0.0, %v2112
  %2114 = vdwg.mxu0
  %2115 = vmatpush.msra.mxu0 0.0
  %2116 = vmatpush.msra.mxu0 0.0
  %2117 = vmatpush.msra.mxu0 0.0
  %2118 = vmatpush.msra.mxu0 0.0
  %2119 = vmatpush.msra.mxu0 0.0
  %2120 = vmatpush.msra.mxu0 0.0
  %2121 = vmatpush.msra.mxu0 0.0
  %2122 = vmatpush.msra.mxu0 0.0
  %2123 = vmatpush.msra.mxu0 0.0
  %2124 = vmatpush.msra.mxu0 0.0
  %2125 = vmatpush.msra.mxu0 0.0
  %2126 = vmatpush.msra.mxu0 0.0
  %2127 = vmatpush.msra.mxu0 0.0
  %2128 = vmatpush.msra.mxu0 0.0
  %2129 = vmatpush.msra.mxu0 0.0
  %2130 = vmatpush.msra.mxu0 %v2092
  %2131 = vmatmul.f32.gmra.mxu0 %v1046
  %v2132 = vpop.f32.mrf.mxu0
  %v2133 = vadd.f32 0.0, %v2132
  %2134 = vdwg.mxu0
  %v2135 = vadd.f32 %v2077, %v2113
  %v2136 = vadd.f32 %v2078, %v2133
  %2137 = vrot.lane.b32.xlu0 %v1757, 95
  %v2138 = vpop.permute.xlu0 %2137
  %2139 = vrot.lane.b32.xlu0 %v1753, 95
  %v2140 = vpop.permute.xlu0 %2139
  %2141 = vrot.lane.b32.xlu0 %v1758, 95
  %v2142 = vpop.permute.xlu0 %2141
  %v2143 = vsel %vm544, %v2138, %v2140
  %v2144 = vsel %vm544, %v2140, %v2142
  %2147 = vmatpush.msra.mxu0 0.0
  %2148 = vmatpush.msra.mxu0 0.0
  %2149 = vmatpush.msra.mxu0 0.0
  %2150 = vmatpush.msra.mxu0 0.0
  %2151 = vmatpush.msra.mxu0 0.0
  %2152 = vmatpush.msra.mxu0 0.0
  %2153 = vmatpush.msra.mxu0 0.0
  %2154 = vmatpush.msra.mxu0 0.0
  %2155 = vmatpush.msra.mxu0 0.0
  %2156 = vmatpush.msra.mxu0 0.0
  %2157 = vmatpush.msra.mxu0 0.0
  %2158 = vmatpush.msra.mxu0 0.0
  %2159 = vmatpush.msra.mxu0 0.0
  %2160 = vmatpush.msra.mxu0 0.0
  %2161 = vmatpush.msra.mxu0 0.0
  %2162 = vmatpush.msra.mxu0 %v2143
  %2163 = vmatmul.f32.gmra.mxu0 %v1101
  %v2164 = vpop.f32.mrf.mxu0
  %v2165 = vadd.f32 0.0, %v2164
  %2166 = vdwg.mxu0
  %2167 = vmatpush.msra.mxu0 0.0
  %2168 = vmatpush.msra.mxu0 0.0
  %2169 = vmatpush.msra.mxu0 0.0
  %2170 = vmatpush.msra.mxu0 0.0
  %2171 = vmatpush.msra.mxu0 0.0
  %2172 = vmatpush.msra.mxu0 0.0
  %2173 = vmatpush.msra.mxu0 0.0
  %2174 = vmatpush.msra.mxu0 0.0
  %2175 = vmatpush.msra.mxu0 0.0
  %2176 = vmatpush.msra.mxu0 0.0
  %2177 = vmatpush.msra.mxu0 0.0
  %2178 = vmatpush.msra.mxu0 0.0
  %2179 = vmatpush.msra.mxu0 0.0
  %2180 = vmatpush.msra.mxu0 0.0
  %2181 = vmatpush.msra.mxu0 0.0
  %2182 = vmatpush.msra.mxu0 %v2144
  %2183 = vmatmul.f32.gmra.mxu0 %v1101
  %v2184 = vpop.f32.mrf.mxu0
  %v2185 = vadd.f32 0.0, %v2184
  %2186 = vdwg.mxu0
  %v2187 = vadd.f32 %v2135, %v2165
  %v2188 = vadd.f32 %v2136, %v2185
  %v2189 = vmul.f32 %v1757, %v597
  %v2190 = vmul.f32 %v1753, %v601
  %v2191 = vmul.f32 %v1758, %v599
  %2195 = vrot.lane.b32.xlu0 %v2189, 94
  %v2196 = vpop.permute.xlu0 %2195
  %2197 = vrot.lane.b32.xlu0 %v2190, 94
  %v2198 = vpop.permute.xlu0 %2197
  %2199 = vrot.lane.b32.xlu0 %v2191, 94
  %v2200 = vpop.permute.xlu0 %2199
  %v2201 = vsel %vm617, %v2196, %v2198
  %v2202 = vsel %vm617, %v2198, %v2200
  %2205 = vmatpush.msra.mxu0 0.0
  %2206 = vmatpush.msra.mxu0 0.0
  %2207 = vmatpush.msra.mxu0 0.0
  %2208 = vmatpush.msra.mxu0 0.0
  %2209 = vmatpush.msra.mxu0 0.0
  %2210 = vmatpush.msra.mxu0 0.0
  %2211 = vmatpush.msra.mxu0 0.0
  %2212 = vmatpush.msra.mxu0 0.0
  %2213 = vmatpush.msra.mxu0 0.0
  %2214 = vmatpush.msra.mxu0 0.0
  %2215 = vmatpush.msra.mxu0 0.0
  %2216 = vmatpush.msra.mxu0 0.0
  %2217 = vmatpush.msra.mxu0 0.0
  %2218 = vmatpush.msra.mxu0 0.0
  %2219 = vmatpush.msra.mxu0 0.0
  %2220 = vmatpush.msra.mxu0 %v2201
  %2221 = vmatmul.f32.gmra.mxu0 %v1162
  %v2222 = vpop.f32.mrf.mxu0
  %v2223 = vadd.f32 0.0, %v2222
  %2224 = vdwg.mxu0
  %2225 = vmatpush.msra.mxu0 0.0
  %2226 = vmatpush.msra.mxu0 0.0
  %2227 = vmatpush.msra.mxu0 0.0
  %2228 = vmatpush.msra.mxu0 0.0
  %2229 = vmatpush.msra.mxu0 0.0
  %2230 = vmatpush.msra.mxu0 0.0
  %2231 = vmatpush.msra.mxu0 0.0
  %2232 = vmatpush.msra.mxu0 0.0
  %2233 = vmatpush.msra.mxu0 0.0
  %2234 = vmatpush.msra.mxu0 0.0
  %2235 = vmatpush.msra.mxu0 0.0
  %2236 = vmatpush.msra.mxu0 0.0
  %2237 = vmatpush.msra.mxu0 0.0
  %2238 = vmatpush.msra.mxu0 0.0
  %2239 = vmatpush.msra.mxu0 0.0
  %2240 = vmatpush.msra.mxu0 %v2202
  %2241 = vmatmul.f32.gmra.mxu0 %v1162
  %v2242 = vpop.f32.mrf.mxu0
  %v2243 = vadd.f32 0.0, %v2242
  %2244 = vdwg.mxu0
  %v2245 = vadd.f32 %v2187, %v2223
  %v2246 = vadd.f32 %v2188, %v2243
  %v2247 = vadd.f32 %v2245, %v1209
  %v2248 = vadd.f32 %v2246, %v1209
  %v2249 = vmax.f32 %v2247, 0.0
  %v2250 = vmax.f32 %v2248, 0.0
  %s2251 = scalar_lea.vmem %s6, 16
  %2252 = vst [vmem:[%s2251] sm:$0xff] %v2249
  %2253 = vst [vmem:[%s2251 + $0x8] sm:$0xff] %v2250
  // Predicated region
  $region26: #{double_conv.1} parent=0 // pred_check
    _
  $region27: #{double_conv.1} parent=0 // pred_check_branch
    %2255 = sbr.rel (0) target = $region29
  $region28: #{double_conv.1} parent=0 // pred_region
    _
  $region29: #{double_conv.1} parent=0 // pred_fallthru
    _
  // Predicated region
  $region30: #{double_conv.1} parent=0 // pred_check
    _
  $region31: #{double_conv.1} parent=0 // pred_check_branch
    %2257 = sbr.rel (0) target = $region33
  $region32: #{double_conv.1} parent=0 // pred_region
    _
  $region33: #{double_conv.1} parent=0 // pred_fallthru
    _

</llo_original>
